<compile_context>
chip_gen: v7x
topology: tpu7x:2x2x1
jax: 0.10.0
libtpu: 0.0.40
codegen_flags: <defaults>
</compile_context>

<pallas_src>
import functools
import math

import jax
import jax.numpy as jnp
import numpy as np
from jax.experimental import pallas as pl
from jax.experimental.pallas import tpu as pltpu


# --------------------------------------------------------------------------
# Kernel bodies
# --------------------------------------------------------------------------
def _attend_and_project(q, k, v, neg_mask_ref, seg_ref, seg_t_ref, wo_ref, o_ref,
                        *, bt, seq, d, scale, mm_dtype):
    """Attention math after the projections.  q, k, v: (bt*seq, d) float32."""
    m_rows = bt * seq

    # --- per-head softmax of q (dim=-1), all heads at once.
    # The stability shift is the per-row global max; softmax is shift-invariant
    # so this equals the per-head-max version exactly.  If a head's logits sit
    # >~80 below the row max its exps underflow; the clamp below keeps the
    # approximate reciprocal finite (that head's output is ~0, which is what
    # underflow implies anyway).
    q_max = jnp.max(q, axis=-1, keepdims=True)                        # (m, 1)
    q_exp = jnp.exp(q - q_max)                                        # (m, d)
    den = jnp.dot(q_exp, seg_ref[...],
                  preferred_element_type=jnp.float32)                 # (m, H)
    den = jnp.maximum(den, jnp.float32(1e-30))
    # Fold the module's total scale**(-0.5) (= d_head**-0.25) into the
    # per-head reciprocal -> no extra scaling pass anywhere else.
    inv = pl.reciprocal(den, approx=True) * scale                     # (m, H)
    q_soft = q_exp * jnp.dot(inv, seg_t_ref[...],
                             preferred_element_type=jnp.float32)      # (m, d)

    # --- context: per batch ctx = k^T @ v (d, d); only the diagonal head
    # blocks are meaningful.  Additive -1e30 mask off the block diagonal so the
    # dim=-2 softmax reproduces the per-head softmax and zeroes everything else.
    kb = k.reshape(bt, seq, d).astype(mm_dtype)
    vb = v.reshape(bt, seq, d).astype(mm_dtype)
    ctx = jnp.einsum('bnd,bne->bde', kb, vb,
                     preferred_element_type=jnp.float32)              # (bt, d, d)
    ctx = ctx + neg_mask_ref[...][None]
    c_max = jnp.max(ctx, axis=-2, keepdims=True)
    c_exp = jnp.exp(ctx - c_max)
    c_sum = jnp.sum(c_exp, axis=-2, keepdims=True)
    ctx_soft = c_exp * pl.reciprocal(c_sum, approx=True)              # (bt, d, d)

    # --- attention (block-diagonal ctx -> one matmul per batch) + out proj.
    att = jnp.einsum('bnd,bde->bne',
                     q_soft.reshape(bt, seq, d).astype(mm_dtype),
                     ctx_soft.astype(mm_dtype),
                     preferred_element_type=jnp.float32)              # (bt, seq, d)
    out = jnp.dot(att.reshape(m_rows, d).astype(mm_dtype), wo_ref[...],
                  preferred_element_type=jnp.float32)
    o_ref[...] = out.astype(o_ref.dtype)


def _esa_self_kernel(x_ref, w_qkv_ref, b_qkv_ref, neg_mask_ref, seg_ref,
                     seg_t_ref, wo_ref, o_ref, *, bt, seq, d, scale, mm_dtype):
    # Fused q/k/v projection: one MXU weight push, one pass over x.
    qkv = jnp.dot(x_ref[...], w_qkv_ref[...],
                  preferred_element_type=jnp.float32) + b_qkv_ref[...]
    q = qkv[:, :d]
    k = qkv[:, d:2 * d]
    v = qkv[:, 2 * d:]
    _attend_and_project(q, k, v, neg_mask_ref, seg_ref, seg_t_ref, wo_ref, o_ref,
                        bt=bt, seq=seq, d=d, scale=scale, mm_dtype=mm_dtype)


def _esa_kvfused_kernel(xq_ref, xkv_ref, wq_ref, bq_ref, w_kv_ref, b_kv_ref,
                        neg_mask_ref, seg_ref, seg_t_ref, wo_ref, o_ref,
                        *, bt, seq, d, scale, mm_dtype):
    # Cross attention with a shared k/v source: fused (D, 2D) k/v projection.
    q = jnp.dot(xq_ref[...], wq_ref[...],
                preferred_element_type=jnp.float32) + bq_ref[...]
    kv = jnp.dot(xkv_ref[...], w_kv_ref[...],
                 preferred_element_type=jnp.float32) + b_kv_ref[...]
    k = kv[:, :d]
    v = kv[:, d:]
    _attend_and_project(q, k, v, neg_mask_ref, seg_ref, seg_t_ref, wo_ref, o_ref,
                        bt=bt, seq=seq, d=d, scale=scale, mm_dtype=mm_dtype)


def _esa_cross_kernel(xq_ref, xk_ref, xv_ref, wq_ref, bq_ref, wk_ref, bk_ref,
                      wv_ref, bv_ref, neg_mask_ref, seg_ref, seg_t_ref, wo_ref,
                      o_ref, *, bt, seq, d, scale, mm_dtype):
    q = jnp.dot(xq_ref[...], wq_ref[...],
                preferred_element_type=jnp.float32) + bq_ref[...]
    k = jnp.dot(xk_ref[...], wk_ref[...],
                preferred_element_type=jnp.float32) + bk_ref[...]
    v = jnp.dot(xv_ref[...], wv_ref[...],
                preferred_element_type=jnp.float32) + bv_ref[...]
    _attend_and_project(q, k, v, neg_mask_ref, seg_ref, seg_t_ref, wo_ref, o_ref,
                        bt=bt, seq=seq, d=d, scale=scale, mm_dtype=mm_dtype)


# --------------------------------------------------------------------------
# Tiling / budgeting helpers
# --------------------------------------------------------------------------
def _tpu_vmem_and_cores():
    """Best-effort (VMEM capacity bytes, TensorCores per chip)."""
    vmem_cap = 64 << 20          # conservative default (v7x per-core VMEM)
    cores = 1
    try:
        info = pltpu.get_tpu_info()
        vmem_cap = int(getattr(info, "vmem_capacity_bytes", vmem_cap))
        cores = int(getattr(info, "num_cores",
                            getattr(info, "core_count", cores)) or cores)
    except Exception:
        pass
    if cores <= 1:
        try:
            if "v7" in jax.devices()[0].device_kind.lower():
                cores = 2        # v7x: 2 TensorCores/chip share the grid
        except Exception:
            pass
    return vmem_cap, cores


def _pick_batch_tile(B, N, D, vmem_limit_bytes, num_cores):
    """Largest batch tile whose per-step working set fits the VMEM budget."""
    # ~48*D bytes per projection row (qkv/q_exp/q_soft/att f32, kb/vb bf16,
    # double-buffered row I/O) + three f32 (D, D) ctx tensors per batch.
    per_batch = 48 * D * N + 12 * D * D
    fixed = 12 * D * D + (4 << 20)               # weights + masks + slack
    budget = max(vmem_limit_bytes - fixed, per_batch)
    bt = int(max(1, min(B, budget // per_batch)))
    bt = max(1, min(bt, 4096 // max(N, 1)))      # cap m_rows around ~4096
    if num_cores >= 2 and B >= 2:
        # Keep >= num_cores grid steps so megacore sharding has work per core.
        bt = min(bt, (B + num_cores - 1) // num_cores)
    if bt < B:
        # Multi-step grid: block rows (bt*N) must be a multiple of 8 (sublane).
        g = 8 // math.gcd(N, 8)
        bt = (bt // g) * g or g
        if bt >= B:                              # rounding swallowed the batch
            bt = B
    n_tiles = -(-B // bt)
    return bt, n_tiles * bt                      # (batch tile, padded batch)


# --------------------------------------------------------------------------
# Wrapper
# --------------------------------------------------------------------------
def efficient_self_attention(xq, xk, xv, params, n_heads, *,
                             matmul_dtype=jnp.bfloat16):
    """params = (wq, bq, wk, bk, wv, bv, wo); weights stored as (in, out) so
    y = x @ W + b.  Pass wo=None for n_heads == 1 (to_out is Dropout only)."""
    B, N, D = xq.shape
    assert xk.shape[0] == B and xk.shape[2] == D and xk.shape == xv.shape
    assert xk.shape[1] == N, "differing q / kv sequence lengths not implemented"
    assert D % n_heads == 0
    d_head = D // n_heads
    scale = float(d_head) ** -0.25   # the module's two scale**(-0.25) factors
    wq, bq, wk, bk, wv, bv, wo = params
    if wo is None:                   # n_heads == 1: to_out = Dropout (identity)
        wo = jnp.eye(D, dtype=jnp.float32)
    wo_q = jnp.asarray(wo, jnp.float32).astype(matmul_dtype)

    # Constant head maps, hoisted out of the per-step kernel body.
    lane_head = np.arange(D) // d_head
    neg_mask = jnp.asarray(
        np.where(lane_head[:, None] == lane_head[None, :], 0.0, -1e30),
        jnp.float32)                                                    # (D, D)
    seg_np = (lane_head[:, None] == np.arange(n_heads)[None, :]
              ).astype(np.float32)                                      # (D, H)
    seg = jnp.asarray(seg_np)
    seg_t = jnp.asarray(np.ascontiguousarray(seg_np.T))                 # (H, D)

    # Generation-aware tiling + explicit VMEM budget.
    vmem_cap, num_cores = _tpu_vmem_and_cores()
    vmem_limit = int(max(32 << 20, min(vmem_cap * 3 // 4, 96 << 20)))
    bt, B_pad = _pick_batch_tile(B, N, D, vmem_limit, num_cores)
    grid = (B_pad // bt,)
    m_rows = bt * N

    cparams = pltpu.CompilerParams(dimension_semantics=("parallel",),
                                   vmem_limit_bytes=vmem_limit)
    kern_kwargs = dict(bt=bt, seq=N, d=D, scale=scale, mm_dtype=matmul_dtype)

    def pad_rows(x):
        # Zero-pad the batch so every grid step gets a full tile; padded rows
        # produce finite garbage that is sliced off below.
        if B_pad != B:
            x = jnp.concatenate(
                [x, jnp.zeros((B_pad - B, N, D), x.dtype)], axis=0)
        return x.reshape(B_pad * N, D).astype(matmul_dtype)

    row_spec = pl.BlockSpec((m_rows, D), lambda i: (i, 0))
    out_shape = jax.ShapeDtypeStruct((B_pad * N, D), xq.dtype)

    def const_spec(shape, buf1):
        # Grid-invariant operand: fetched once; single-buffered when supported.
        if buf1 is None:
            return pl.BlockSpec(shape, lambda i: (0, 0))
        return pl.BlockSpec(shape, lambda i: (0, 0), pipeline_mode=buf1)

    def run(buf1):
        mask_specs = [const_spec((D, D), buf1),
                      const_spec((D, n_heads), buf1),
                      const_spec((n_heads, D), buf1)]
        if xq is xk and xq is xv:
            # Self-attention fast path (forward_single): one DMA of x, fused qkv.
            w_qkv = jnp.concatenate([wq, wk, wv], axis=1).astype(matmul_dtype)
            b_qkv = jnp.concatenate([bq, bk, bv], axis=1).astype(jnp.float32)
            in_specs = ([row_spec,
                         const_spec((D, 3 * D), buf1),
                         const_spec((1, 3 * D), buf1)]
                        + mask_specs + [const_spec((D, D), buf1)])
            return pl.pallas_call(
                functools.partial(_esa_self_kernel, **kern_kwargs),
                out_shape=out_shape,
                grid_spec=pltpu.PrefetchScalarGridSpec(
                    num_scalar_prefetch=0, grid=grid,
                    in_specs=in_specs, out_specs=row_spec),
                compiler_params=cparams,
            )(pad_rows(xq), w_qkv, b_qkv, neg_mask, seg, seg_t, wo_q)
        elif xk is xv:
            # Cross attention with shared memory input: fused (D, 2D) k/v proj.
            w_kv = jnp.concatenate([wk, wv], axis=1).astype(matmul_dtype)
            b_kv = jnp.concatenate([bk, bv], axis=1).astype(jnp.float32)
            in_specs = ([row_spec, row_spec,
                         const_spec((D, D), buf1), const_spec((1, D), buf1),
                         const_spec((D, 2 * D), buf1),
                         const_spec((1, 2 * D), buf1)]
                        + mask_specs + [const_spec((D, D), buf1)])
            return pl.pallas_call(
                functools.partial(_esa_kvfused_kernel, **kern_kwargs),
                out_shape=out_shape,
                grid_spec=pltpu.PrefetchScalarGridSpec(
                    num_scalar_prefetch=0, grid=grid,
                    in_specs=in_specs, out_specs=row_spec),
                compiler_params=cparams,
            )(pad_rows(xq), pad_rows(xk),
              wq.astype(matmul_dtype), bq.astype(jnp.float32),
              w_kv, b_kv, neg_mask, seg, seg_t, wo_q)
        else:
            in_specs = ([row_spec, row_spec, row_spec,
                         const_spec((D, D), buf1), const_spec((1, D), buf1),
                         const_spec((D, D), buf1), const_spec((1, D), buf1),
                         const_spec((D, D), buf1), const_spec((1, D), buf1)]
                        + mask_specs + [const_spec((D, D), buf1)])
            return pl.pallas_call(
                functools.partial(_esa_cross_kernel, **kern_kwargs),
                out_shape=out_shape,
                grid_spec=pltpu.PrefetchScalarGridSpec(
                    num_scalar_prefetch=0, grid=grid,
                    in_specs=in_specs, out_specs=row_spec),
                compiler_params=cparams,
            )(pad_rows(xq), pad_rows(xk), pad_rows(xv),
              wq.astype(matmul_dtype), bq.astype(jnp.float32),
              wk.astype(matmul_dtype), bk.astype(jnp.float32),
              wv.astype(matmul_dtype), bv.astype(jnp.float32),
              neg_mask, seg, seg_t, wo_q)

    try:
        out = run(pl.Buffered(1))    # single-buffer grid-invariant operands
    except Exception:
        # TODO(synk): this jax version rejected pipeline_mode=pl.Buffered(1);
        # fall back to default double-buffered weight/mask specs.
        out = run(None)

    return out[:B * N].reshape(B, N, D)


# --------------------------------------------------------------------------
# Pure-JAX reference + self-test
# --------------------------------------------------------------------------
def reference(xq, xk, xv, params, n_heads):
    """Pure-JAX f32 replica of the PyTorch forward (dropout = identity)."""
    wq, bq, wk, bk, wv, bv, wo = params
    B, N, D = xq.shape
    dh = D // n_heads
    q = xq @ wq + bq
    k = xk @ wk + bk
    v = xv @ wv + bv

    def split(t):  # 'b n (h d) -> b h n d'
        return t.reshape(B, N, n_heads, dh).transpose(0, 2, 1, 3)

    q, k, v = split(q), split(k), split(v)
    sf = dh ** (-0.125)
    q = jax.nn.softmax(q, axis=-1) * sf
    ctx = jnp.einsum('bhnd,bhne->bhde', k, v)
    ctx = jax.nn.softmax(ctx, axis=-2) * sf
    att = jnp.einsum('bhnd,bhde->bhne', q, ctx)
    att = att.transpose(0, 2, 1, 3).reshape(B, N, D)   # 'b h n d -> b n (h d)'
    return att @ wo


def _q16(t):  # emulate the kernel's bf16 weight/input quantization
    return t.astype(jnp.bfloat16).astype(jnp.float32)


if __name__ == "__main__":
    B, N, D, H = 2, 8, 32, 4           # batch, seq, d_hidden, n_heads (d_head = 8)

    key = jax.random.PRNGKey(0)
    keys = jax.random.split(key, 10)

    # xavier_uniform for q/k/v/out weights (stored as (in, out) = W_pytorch.T)
    xav = (6.0 / (D + D)) ** 0.5
    wq = jax.random.uniform(keys[0], (D, D), jnp.float32, -xav, xav)
    wk = jax.random.uniform(keys[1], (D, D), jnp.float32, -xav, xav)
    wv = jax.random.uniform(keys[2], (D, D), jnp.float32, -xav, xav)
    wo = jax.random.uniform(keys[3], (D, D), jnp.float32, -xav, xav)
    # biases: PyTorch Linear default U(-1/sqrt(fan_in), 1/sqrt(fan_in))
    bb = 1.0 / (D ** 0.5)
    bq = jax.random.uniform(keys[4], (1, D), jnp.float32, -bb, bb)
    bk = jax.random.uniform(keys[5], (1, D), jnp.float32, -bb, bb)
    bv = jax.random.uniform(keys[6], (1, D), jnp.float32, -bb, bb)

    x = jax.random.normal(keys[7], (B, N, D), jnp.float32)
    params = (wq, bq, wk, bk, wv, bv, wo)
    # reference uses the same bf16-quantized weights/inputs as the kernel
    params_q = (_q16(wq), bq, _q16(wk), bk, _q16(wv), bv, _q16(wo))

    # --- self-attention path (forward_single) ---
    out = efficient_self_attention(x, x, x, params, H)
    out = jax.block_until_ready(out)
    assert out.shape == (B, N, D)
    ref = reference(_q16(x), _q16(x), _q16(x), params_q, H)
    np.testing.assert_allclose(np.asarray(out), np.asarray(ref),
                               rtol=2e-2, atol=2e-2)

    # --- general forward(q, k, v) path with distinct inputs ---
    xk_in = jax.random.normal(keys[8], (B, N, D), jnp.float32)
    xv_in = jax.random.normal(keys[9], (B, N, D), jnp.float32)
    out2 = jax.block_until_ready(
        efficient_self_attention(x, xk_in, xv_in, params, H))
    ref2 = reference(_q16(x), _q16(xk_in), _q16(xv_in), params_q, H)
    np.testing.assert_allclose(np.asarray(out2), np.asarray(ref2),
                               rtol=2e-2, atol=2e-2)

    # --- cross path with shared k/v source (fused (D, 2D) k/v projection) ---
    out3 = jax.block_until_ready(
        efficient_self_attention(x, xk_in, xk_in, params, H))
    ref3 = reference(_q16(x), _q16(xk_in), _q16(xk_in), params_q, H)
    np.testing.assert_allclose(np.asarray(out3), np.asarray(ref3),
                               rtol=2e-2, atol=2e-2)

    print("KERNEL_OK")
</pallas_src>

<mosaic_0001>
module attributes {stable_mosaic.version = 11 : i64} {
  func.func @_esa_self_kernel(%arg0: i32, %arg1: memref<16x32xbf16, #tpu.memory_space<vmem>>, %arg2: memref<32x96xbf16, #tpu.memory_space<vmem>>, %arg3: memref<1x96xf32, #tpu.memory_space<vmem>>, %arg4: memref<32x32xf32, #tpu.memory_space<vmem>>, %arg5: memref<32x4xf32, #tpu.memory_space<vmem>>, %arg6: memref<4x32xf32, #tpu.memory_space<vmem>>, %arg7: memref<32x32xbf16, #tpu.memory_space<vmem>>, %arg8: memref<16x32xf32, #tpu.memory_space<vmem>>) attributes {dimension_semantics = [#tpu.dimension_semantics<parallel>], iteration_bounds = array<i64: 1>, scalar_prefetch = 0 : i64, scratch_operands = 0 : i64, tpu.core_type = #tpu.core_type<tc>, window_params = [{transform_indices = @transform_0, window_bounds = array<i64: 16, 32>}, {pipeline_mode = #tpu.pipeline_mode<synchronous>, transform_indices = @transform_1, window_bounds = array<i64: 32, 96>}, {pipeline_mode = #tpu.pipeline_mode<synchronous>, transform_indices = @transform_2, window_bounds = array<i64: 1, 96>}, {pipeline_mode = #tpu.pipeline_mode<synchronous>, transform_indices = @transform_3, window_bounds = array<i64: 32, 32>}, {pipeline_mode = #tpu.pipeline_mode<synchronous>, transform_indices = @transform_4, window_bounds = array<i64: 32, 4>}, {pipeline_mode = #tpu.pipeline_mode<synchronous>, transform_indices = @transform_5, window_bounds = array<i64: 4, 32>}, {pipeline_mode = #tpu.pipeline_mode<synchronous>, transform_indices = @transform_6, window_bounds = array<i64: 32, 32>}, {transform_indices = @transform_7, window_bounds = array<i64: 16, 32>}]} {
    %c0 = arith.constant 0 : index
    %c0_0 = arith.constant 0 : index
    %0 = vector.load %arg1[%c0, %c0_0] : memref<16x32xbf16, #tpu.memory_space<vmem>>, vector<16x32xbf16>
    %c0_1 = arith.constant 0 : index
    %c0_2 = arith.constant 0 : index
    %1 = vector.load %arg2[%c0_1, %c0_2] : memref<32x96xbf16, #tpu.memory_space<vmem>>, vector<32x96xbf16>
    %cst = arith.constant dense<0.000000e+00> : vector<16x96xf32>
    %2 = tpu.matmul %0, %1, %cst {dimension_numbers = #tpu.dot_dimension_numbers<[1], [0], [0], [1], [0, 0, 1, 1], [], []>} : vector<16x32xbf16>, vector<32x96xbf16>, vector<16x96xf32> -> vector<16x96xf32>
    %c0_3 = arith.constant 0 : index
    %c0_4 = arith.constant 0 : index
    %3 = vector.load %arg3[%c0_3, %c0_4] : memref<1x96xf32, #tpu.memory_space<vmem>>, vector<1x96xf32>
    %4 = vector.broadcast %3 : vector<1x96xf32> to vector<16x96xf32>
    %5 = arith.addf %2, %4 : vector<16x96xf32>
    %6 = vector.extract_strided_slice %5 {offsets = [0, 0], sizes = [16, 32], strides = [1, 1]} : vector<16x96xf32> to vector<16x32xf32>
    %7 = vector.extract_strided_slice %5 {offsets = [0, 32], sizes = [16, 32], strides = [1, 1]} : vector<16x96xf32> to vector<16x32xf32>
    %8 = vector.extract_strided_slice %5 {offsets = [0, 64], sizes = [16, 32], strides = [1, 1]} : vector<16x96xf32> to vector<16x32xf32>
    %cst_5 = arith.constant dense<0xFF800000> : vector<16xf32>
    %9 = vector.multi_reduction <maximumf>, %6, %cst_5 [1] : vector<16x32xf32> to vector<16xf32>
    %10 = vector.shape_cast %9 : vector<16xf32> to vector<16x1xf32>
    %11 = vector.broadcast %10 : vector<16x1xf32> to vector<16x32xf32>
    %12 = arith.subf %6, %11 : vector<16x32xf32>
    %13 = math.exp %12 : vector<16x32xf32>
    %c0_6 = arith.constant 0 : index
    %c0_7 = arith.constant 0 : index
    %14 = vector.load %arg5[%c0_6, %c0_7] : memref<32x4xf32, #tpu.memory_space<vmem>>, vector<32x4xf32>
    %cst_8 = arith.constant dense<0.000000e+00> : vector<16x4xf32>
    %15 = tpu.matmul %13, %14, %cst_8 {dimension_numbers = #tpu.dot_dimension_numbers<[1], [0], [0], [1], [0, 0, 1, 1], [], []>} : vector<16x32xf32>, vector<32x4xf32>, vector<16x4xf32> -> vector<16x4xf32>
    %cst_9 = arith.constant 1.000000e-30 : f32
    %16 = vector.broadcast %cst_9 : f32 to vector<16x4xf32>
    %17 = arith.maximumf %15, %16 : vector<16x4xf32>
    %18 = tpu.reciprocal %17 {approx = true} : vector<16x4xf32> -> vector<16x4xf32>
    %cst_10 = arith.constant 0.594603539 : f32
    %19 = vector.broadcast %cst_10 : f32 to vector<16x4xf32>
    %20 = arith.mulf %18, %19 : vector<16x4xf32>
    %c0_11 = arith.constant 0 : index
    %c0_12 = arith.constant 0 : index
    %21 = vector.load %arg6[%c0_11, %c0_12] : memref<4x32xf32, #tpu.memory_space<vmem>>, vector<4x32xf32>
    %cst_13 = arith.constant dense<0.000000e+00> : vector<16x32xf32>
    %22 = tpu.matmul %20, %21, %cst_13 {dimension_numbers = #tpu.dot_dimension_numbers<[1], [0], [0], [1], [0, 0, 1, 1], [], []>} : vector<16x4xf32>, vector<4x32xf32>, vector<16x32xf32> -> vector<16x32xf32>
    %23 = arith.mulf %13, %22 : vector<16x32xf32>
    %24 = vector.shape_cast %7 : vector<16x32xf32> to vector<2x8x32xf32>
    %25 = arith.truncf %24 : vector<2x8x32xf32> to vector<2x8x32xbf16>
    %26 = vector.shape_cast %8 : vector<16x32xf32> to vector<2x8x32xf32>
    %27 = arith.truncf %26 : vector<2x8x32xf32> to vector<2x8x32xbf16>
    "tpu.trace_start"() <{level = 10 : i32, message = "bnd,bne->bde"}> : () -> ()
    %cst_14 = arith.constant dense<0.000000e+00> : vector<2x32x32xf32>
    %28 = tpu.matmul %25, %27, %cst_14 {dimension_numbers = #tpu.dot_dimension_numbers<[1], [1], [2], [2], [0, 0, 0, 2, 1, 2], [0], [0]>} : vector<2x8x32xbf16>, vector<2x8x32xbf16>, vector<2x32x32xf32> -> vector<2x32x32xf32>
    "tpu.trace_stop"() : () -> ()
    %c0_15 = arith.constant 0 : index
    %c0_16 = arith.constant 0 : index
    %29 = vector.load %arg4[%c0_15, %c0_16] : memref<32x32xf32, #tpu.memory_space<vmem>>, vector<32x32xf32>
    %30 = vector.shape_cast %29 : vector<32x32xf32> to vector<1x32x32xf32>
    %31 = vector.broadcast %30 : vector<1x32x32xf32> to vector<2x32x32xf32>
    %32 = arith.addf %28, %31 : vector<2x32x32xf32>
    %cst_17 = arith.constant dense<0xFF800000> : vector<2x32xf32>
    %33 = vector.multi_reduction <maximumf>, %32, %cst_17 [1] : vector<2x32x32xf32> to vector<2x32xf32>
    %34 = vector.shape_cast %33 : vector<2x32xf32> to vector<2x1x32xf32>
    %35 = vector.broadcast %34 : vector<2x1x32xf32> to vector<2x32x32xf32>
    %36 = arith.subf %32, %35 : vector<2x32x32xf32>
    %37 = math.exp %36 : vector<2x32x32xf32>
    %cst_18 = arith.constant dense<0.000000e+00> : vector<2x32xf32>
    %38 = vector.multi_reduction <add>, %37, %cst_18 [1] : vector<2x32x32xf32> to vector<2x32xf32>
    %39 = vector.shape_cast %38 : vector<2x32xf32> to vector<2x1x32xf32>
    %40 = tpu.reciprocal %39 {approx = true} : vector<2x1x32xf32> -> vector<2x1x32xf32>
    %41 = vector.broadcast %40 : vector<2x1x32xf32> to vector<2x32x32xf32>
    %42 = arith.mulf %37, %41 : vector<2x32x32xf32>
    %43 = vector.shape_cast %23 : vector<16x32xf32> to vector<2x8x32xf32>
    %44 = arith.truncf %43 : vector<2x8x32xf32> to vector<2x8x32xbf16>
    %45 = arith.truncf %42 : vector<2x32x32xf32> to vector<2x32x32xbf16>
    "tpu.trace_start"() <{level = 10 : i32, message = "bnd,bde->bne"}> : () -> ()
    %cst_19 = arith.constant dense<0.000000e+00> : vector<2x8x32xf32>
    %46 = tpu.matmul %44, %45, %cst_19 {dimension_numbers = #tpu.dot_dimension_numbers<[2], [1], [1], [2], [0, 0, 0, 1, 1, 2], [0], [0]>} : vector<2x8x32xbf16>, vector<2x32x32xbf16>, vector<2x8x32xf32> -> vector<2x8x32xf32>
    "tpu.trace_stop"() : () -> ()
    %47 = vector.shape_cast %46 : vector<2x8x32xf32> to vector<16x32xf32>
    %48 = arith.truncf %47 : vector<16x32xf32> to vector<16x32xbf16>
    %c0_20 = arith.constant 0 : index
    %c0_21 = arith.constant 0 : index
    %49 = vector.load %arg7[%c0_20, %c0_21] : memref<32x32xbf16, #tpu.memory_space<vmem>>, vector<32x32xbf16>
    %cst_22 = arith.constant dense<0.000000e+00> : vector<16x32xf32>
    %50 = tpu.matmul %48, %49, %cst_22 {dimension_numbers = #tpu.dot_dimension_numbers<[1], [0], [0], [1], [0, 0, 1, 1], [], []>} : vector<16x32xbf16>, vector<32x32xbf16>, vector<16x32xf32> -> vector<16x32xf32>
    %c0_23 = arith.constant 0 : index
    %c0_24 = arith.constant 0 : index
    %51 = vector.load %arg8[%c0_23, %c0_24] : memref<16x32xf32, #tpu.memory_space<vmem>>, vector<16x32xf32>
    tpu.vector_store %arg8[%c0_23, %c0_24], %50 {strides = array<i32>} : memref<16x32xf32, #tpu.memory_space<vmem>>, vector<16x32xf32>,
    return
  }
  func.func @transform_0(%arg0: i32) -> (i32, i32) {
    %c0_i32 = arith.constant 0 : i32
    %c0_i32_0 = arith.constant 0 : i32
    return %arg0, %c0_i32 : i32, i32
  }
  func.func @transform_1(%arg0: i32) -> (i32, i32) {
    %c0_i32 = arith.constant 0 : i32
    %c0_i32_0 = arith.constant 0 : i32
    %c0_i32_1 = arith.constant 0 : i32
    return %c0_i32, %c0_i32_0 : i32, i32
  }
  func.func @transform_2(%arg0: i32) -> (i32, i32) {
    %c0_i32 = arith.constant 0 : i32
    %c0_i32_0 = arith.constant 0 : i32
    %c0_i32_1 = arith.constant 0 : i32
    return %c0_i32, %c0_i32_0 : i32, i32
  }
  func.func @transform_3(%arg0: i32) -> (i32, i32) {
    %c0_i32 = arith.constant 0 : i32
    %c0_i32_0 = arith.constant 0 : i32
    %c0_i32_1 = arith.constant 0 : i32
    return %c0_i32, %c0_i32_0 : i32, i32
  }
  func.func @transform_4(%arg0: i32) -> (i32, i32) {
    %c0_i32 = arith.constant 0 : i32
    %c0_i32_0 = arith.constant 0 : i32
    %c0_i32_1 = arith.constant 0 : i32
    return %c0_i32, %c0_i32_0 : i32, i32
  }
  func.func @transform_5(%arg0: i32) -> (i32, i32) {
    %c0_i32 = arith.constant 0 : i32
    %c0_i32_0 = arith.constant 0 : i32
    %c0_i32_1 = arith.constant 0 : i32
    return %c0_i32, %c0_i32_0 : i32, i32
  }
  func.func @transform_6(%arg0: i32) -> (i32, i32) {
    %c0_i32 = arith.constant 0 : i32
    %c0_i32_0 = arith.constant 0 : i32
    %c0_i32_1 = arith.constant 0 : i32
    return %c0_i32, %c0_i32_0 : i32, i32
  }
  func.func @transform_7(%arg0: i32) -> (i32, i32) {
    %c0_i32 = arith.constant 0 : i32
    %c0_i32_0 = arith.constant 0 : i32
    return %arg0, %c0_i32 : i32, i32
  }
}

module attributes {stable_mosaic.version = 11 : i64} {
  func.func @_esa_self_kernel(%arg0: i32, %arg1: memref<16x32xbf16, #tpu.memory_space<vmem>>, %arg2: memref<32x96xbf16, #tpu.memory_space<vmem>>, %arg3: memref<1x96xf32, #tpu.memory_space<vmem>>, %arg4: memref<32x32xf32, #tpu.memory_space<vmem>>, %arg5: memref<32x4xf32, #tpu.memory_space<vmem>>, %arg6: memref<4x32xf32, #tpu.memory_space<vmem>>, %arg7: memref<32x32xbf16, #tpu.memory_space<vmem>>, %arg8: memref<16x32xf32, #tpu.memory_space<vmem>>) attributes {dimension_semantics = [#tpu.dimension_semantics<parallel>], iteration_bounds = array<i64: 1>, scalar_prefetch = 0 : i64, scratch_operands = 0 : i64, tpu.core_type = #tpu.core_type<tc>, window_params = [{transform_indices = @transform_0, window_bounds = array<i64: 16, 32>}, {pipeline_mode = #tpu.pipeline_mode<synchronous>, transform_indices = @transform_1, window_bounds = array<i64: 32, 96>}, {pipeline_mode = #tpu.pipeline_mode<synchronous>, transform_indices = @transform_2, window_bounds = array<i64: 1, 96>}, {pipeline_mode = #tpu.pipeline_mode<synchronous>, transform_indices = @transform_3, window_bounds = array<i64: 32, 32>}, {pipeline_mode = #tpu.pipeline_mode<synchronous>, transform_indices = @transform_4, window_bounds = array<i64: 32, 4>}, {pipeline_mode = #tpu.pipeline_mode<synchronous>, transform_indices = @transform_5, window_bounds = array<i64: 4, 32>}, {pipeline_mode = #tpu.pipeline_mode<synchronous>, transform_indices = @transform_6, window_bounds = array<i64: 32, 32>}, {transform_indices = @transform_7, window_bounds = array<i64: 16, 32>}]} {
    %c0 = arith.constant 0 : index
    %c0_0 = arith.constant 0 : index
    %0 = vector.load %arg1[%c0, %c0_0] : memref<16x32xbf16, #tpu.memory_space<vmem>>, vector<16x32xbf16>
    %c0_1 = arith.constant 0 : index
    %c0_2 = arith.constant 0 : index
    %1 = vector.load %arg2[%c0_1, %c0_2] : memref<32x96xbf16, #tpu.memory_space<vmem>>, vector<32x96xbf16>
    %cst = arith.constant dense<0.000000e+00> : vector<16x96xf32>
    %2 = tpu.matmul %0, %1, %cst {dimension_numbers = #tpu.dot_dimension_numbers<[1], [0], [0], [1], [0, 0, 1, 1], [], []>} : vector<16x32xbf16>, vector<32x96xbf16>, vector<16x96xf32> -> vector<16x96xf32>
    %c0_3 = arith.constant 0 : index
    %c0_4 = arith.constant 0 : index
    %3 = vector.load %arg3[%c0_3, %c0_4] : memref<1x96xf32, #tpu.memory_space<vmem>>, vector<1x96xf32>
    %4 = vector.broadcast %3 : vector<1x96xf32> to vector<16x96xf32>
    %5 = arith.addf %2, %4 : vector<16x96xf32>
    %6 = vector.extract_strided_slice %5 {offsets = [0, 0], sizes = [16, 32], strides = [1, 1]} : vector<16x96xf32> to vector<16x32xf32>
    %7 = vector.extract_strided_slice %5 {offsets = [0, 32], sizes = [16, 32], strides = [1, 1]} : vector<16x96xf32> to vector<16x32xf32>
    %8 = vector.extract_strided_slice %5 {offsets = [0, 64], sizes = [16, 32], strides = [1, 1]} : vector<16x96xf32> to vector<16x32xf32>
    %cst_5 = arith.constant dense<0xFF800000> : vector<16xf32>
    %9 = vector.multi_reduction <maximumf>, %6, %cst_5 [1] : vector<16x32xf32> to vector<16xf32>
    %10 = vector.shape_cast %9 : vector<16xf32> to vector<16x1xf32>
    %11 = vector.broadcast %10 : vector<16x1xf32> to vector<16x32xf32>
    %12 = arith.subf %6, %11 : vector<16x32xf32>
    %13 = math.exp %12 : vector<16x32xf32>
    %c0_6 = arith.constant 0 : index
    %c0_7 = arith.constant 0 : index
    %14 = vector.load %arg5[%c0_6, %c0_7] : memref<32x4xf32, #tpu.memory_space<vmem>>, vector<32x4xf32>
    %cst_8 = arith.constant dense<0.000000e+00> : vector<16x4xf32>
    %15 = tpu.matmul %13, %14, %cst_8 {dimension_numbers = #tpu.dot_dimension_numbers<[1], [0], [0], [1], [0, 0, 1, 1], [], []>} : vector<16x32xf32>, vector<32x4xf32>, vector<16x4xf32> -> vector<16x4xf32>
    %cst_9 = arith.constant 1.000000e-30 : f32
    %16 = vector.broadcast %cst_9 : f32 to vector<16x4xf32>
    %17 = arith.maximumf %15, %16 : vector<16x4xf32>
    %18 = tpu.reciprocal %17 {approx = true} : vector<16x4xf32> -> vector<16x4xf32>
    %cst_10 = arith.constant 0.594603539 : f32
    %19 = vector.broadcast %cst_10 : f32 to vector<16x4xf32>
    %20 = arith.mulf %18, %19 : vector<16x4xf32>
    %c0_11 = arith.constant 0 : index
    %c0_12 = arith.constant 0 : index
    %21 = vector.load %arg6[%c0_11, %c0_12] : memref<4x32xf32, #tpu.memory_space<vmem>>, vector<4x32xf32>
    %cst_13 = arith.constant dense<0.000000e+00> : vector<16x32xf32>
    %22 = tpu.matmul %20, %21, %cst_13 {dimension_numbers = #tpu.dot_dimension_numbers<[1], [0], [0], [1], [0, 0, 1, 1], [], []>} : vector<16x4xf32>, vector<4x32xf32>, vector<16x32xf32> -> vector<16x32xf32>
    %23 = arith.mulf %13, %22 : vector<16x32xf32>
    %24 = vector.shape_cast %7 : vector<16x32xf32> to vector<2x8x32xf32>
    %25 = arith.truncf %24 : vector<2x8x32xf32> to vector<2x8x32xbf16>
    %26 = vector.shape_cast %8 : vector<16x32xf32> to vector<2x8x32xf32>
    %27 = arith.truncf %26 : vector<2x8x32xf32> to vector<2x8x32xbf16>
    "tpu.trace_start"() <{level = 10 : i32, message = "bnd,bne->bde"}> : () -> ()
    %cst_14 = arith.constant dense<0.000000e+00> : vector<2x32x32xf32>
    %28 = tpu.matmul %25, %27, %cst_14 {dimension_numbers = #tpu.dot_dimension_numbers<[1], [1], [2], [2], [0, 0, 0, 2, 1, 2], [0], [0]>} : vector<2x8x32xbf16>, vector<2x8x32xbf16>, vector<2x32x32xf32> -> vector<2x32x32xf32>
    "tpu.trace_stop"() : () -> ()
    %c0_15 = arith.constant 0 : index
    %c0_16 = arith.constant 0 : index
    %29 = vector.load %arg4[%c0_15, %c0_16] : memref<32x32xf32, #tpu.memory_space<vmem>>, vector<32x32xf32>
    %30 = vector.shape_cast %29 : vector<32x32xf32> to vector<1x32x32xf32>
    %31 = vector.broadcast %30 : vector<1x32x32xf32> to vector<2x32x32xf32>
    %32 = arith.addf %28, %31 : vector<2x32x32xf32>
    %cst_17 = arith.constant dense<0xFF800000> : vector<2x32xf32>
    %33 = vector.multi_reduction <maximumf>, %32, %cst_17 [1] : vector<2x32x32xf32> to vector<2x32xf32>
    %34 = vector.shape_cast %33 : vector<2x32xf32> to vector<2x1x32xf32>
    %35 = vector.broadcast %34 : vector<2x1x32xf32> to vector<2x32x32xf32>
    %36 = arith.subf %32, %35 : vector<2x32x32xf32>
    %37 = math.exp %36 : vector<2x32x32xf32>
    %cst_18 = arith.constant dense<0.000000e+00> : vector<2x32xf32>
    %38 = vector.multi_reduction <add>, %37, %cst_18 [1] : vector<2x32x32xf32> to vector<2x32xf32>
    %39 = vector.shape_cast %38 : vector<2x32xf32> to vector<2x1x32xf32>
    %40 = tpu.reciprocal %39 {approx = true} : vector<2x1x32xf32> -> vector<2x1x32xf32>
    %41 = vector.broadcast %40 : vector<2x1x32xf32> to vector<2x32x32xf32>
    %42 = arith.mulf %37, %41 : vector<2x32x32xf32>
    %43 = vector.shape_cast %23 : vector<16x32xf32> to vector<2x8x32xf32>
    %44 = arith.truncf %43 : vector<2x8x32xf32> to vector<2x8x32xbf16>
    %45 = arith.truncf %42 : vector<2x32x32xf32> to vector<2x32x32xbf16>
    "tpu.trace_start"() <{level = 10 : i32, message = "bnd,bde->bne"}> : () -> ()
    %cst_19 = arith.constant dense<0.000000e+00> : vector<2x8x32xf32>
    %46 = tpu.matmul %44, %45, %cst_19 {dimension_numbers = #tpu.dot_dimension_numbers<[2], [1], [1], [2], [0, 0, 0, 1, 1, 2], [0], [0]>} : vector<2x8x32xbf16>, vector<2x32x32xbf16>, vector<2x8x32xf32> -> vector<2x8x32xf32>
    "tpu.trace_stop"() : () -> ()
    %47 = vector.shape_cast %46 : vector<2x8x32xf32> to vector<16x32xf32>
    %48 = arith.truncf %47 : vector<16x32xf32> to vector<16x32xbf16>
    %c0_20 = arith.constant 0 : index
    %c0_21 = arith.constant 0 : index
    %49 = vector.load %arg7[%c0_20, %c0_21] : memref<32x32xbf16, #tpu.memory_space<vmem>>, vector<32x32xbf16>
    %cst_22 = arith.constant dense<0.000000e+00> : vector<16x32xf32>
    %50 = tpu.matmul %48, %49, %cst_22 {dimension_numbers = #tpu.dot_dimension_numbers<[1], [0], [0], [1], [0, 0, 1, 1], [], []>} : vector<16x32xbf16>, vector<32x32xbf16>, vector<16x32xf32> -> vector<16x32xf32>
    %c0_23 = arith.constant 0 : index
    %c0_24 = arith.constant 0 : index
    %51 = vector.load %arg8[%c0_23, %c0_24] : memref<16x32xf32, #tpu.memory_space<vmem>>, vector<16x32xf32>
    tpu.vector_store %arg8[%c0_23, %c0_24], %50 {strides = array<i32>} : memref<16x32xf32, #tpu.memory_space<vmem>>, vector<16x32xf32>,
    return
  }
  func.func @transform_0(%arg0: i32) -> (i32, i32) {
    %c0_i32 = arith.constant 0 : i32
    %c0_i32_0 = arith.constant 0 : i32
    return %arg0, %c0_i32 : i32, i32
  }
  func.func @transform_1(%arg0: i32) -> (i32, i32) {
    %c0_i32 = arith.constant 0 : i32
    %c0_i32_0 = arith.constant 0 : i32
    %c0_i32_1 = arith.constant 0 : i32
    return %c0_i32, %c0_i32_0 : i32, i32
  }
  func.func @transform_2(%arg0: i32) -> (i32, i32) {
    %c0_i32 = arith.constant 0 : i32
    %c0_i32_0 = arith.constant 0 : i32
    %c0_i32_1 = arith.constant 0 : i32
    return %c0_i32, %c0_i32_0 : i32, i32
  }
  func.func @transform_3(%arg0: i32) -> (i32, i32) {
    %c0_i32 = arith.constant 0 : i32
    %c0_i32_0 = arith.constant 0 : i32
    %c0_i32_1 = arith.constant 0 : i32
    return %c0_i32, %c0_i32_0 : i32, i32
  }
  func.func @transform_4(%arg0: i32) -> (i32, i32) {
    %c0_i32 = arith.constant 0 : i32
    %c0_i32_0 = arith.constant 0 : i32
    %c0_i32_1 = arith.constant 0 : i32
    return %c0_i32, %c0_i32_0 : i32, i32
  }
  func.func @transform_5(%arg0: i32) -> (i32, i32) {
    %c0_i32 = arith.constant 0 : i32
    %c0_i32_0 = arith.constant 0 : i32
    %c0_i32_1 = arith.constant 0 : i32
    return %c0_i32, %c0_i32_0 : i32, i32
  }
  func.func @transform_6(%arg0: i32) -> (i32, i32) {
    %c0_i32 = arith.constant 0 : i32
    %c0_i32_0 = arith.constant 0 : i32
    %c0_i32_1 = arith.constant 0 : i32
    return %c0_i32, %c0_i32_0 : i32, i32
  }
  func.func @transform_7(%arg0: i32) -> (i32, i32) {
    %c0_i32 = arith.constant 0 : i32
    %c0_i32_0 = arith.constant 0 : i32
    return %arg0, %c0_i32 : i32, i32
  }
}

</mosaic_0001>

<llo_original>
// kernel: tpu_custom_call.1
$region0: #{tpu_custom_call.1}
  #allocation0 [shape = 'u32[]', space=smem, size = 0x4, offset = 0x4, fixed_abs, tag = 'smem constant byte address 0x4 - core index']
  #allocation1 [shape = 'u32[144,128]{1,0:T(1,128)}', space=vmem, size = 0x12000, scoped, tag = 'internal scratch']
  %s0 = inlined_call_operand.hbm [shape: bf16[16,32], index: 0, kind: input, shape index: {}]
  %s1 = inlined_call_operand.hbm [shape: bf16[32,96], index: 1, kind: input, shape index: {}]
  %s2 = inlined_call_operand.vmem [shape: f32[1,96], index: 2, kind: input, shape index: {}]
  %s3 = inlined_call_operand.vmem [shape: f32[32,32], index: 3, kind: input, shape index: {}]
  %s4 = inlined_call_operand.vmem [shape: f32[32,4], index: 4, kind: input, shape index: {}]
  %s5 = inlined_call_operand.vmem [shape: f32[4,32], index: 5, kind: input, shape index: {}]
  %s6 = inlined_call_operand.vmem [shape: bf16[32,32], index: 6, kind: input, shape index: {}]
  %s7 = inlined_call_operand.hbm [shape: f32[16,32], index: 7, kind: output, shape index: {}]
  %s8 = sld [smem:[#allocation0]]
  $region46: #{tpu_custom_call.1} parent=0
    _
  %s10 = ssub.s32 1, %s8
  %s11 = scalar_select 0, %s10, %s8
  $region1: #{tpu_custom_call.1} parent=0
    #allocation2 [shape = 'u8[4096]{0}', space=vmem, size = 0x1000, scoped, tag = 'input window, operand 0, single buffered']
    #allocation3 [shape = 's32[1]{0}', space=sflag, size = 0x4, scoped, tag = 'scoped memory for tpu_custom_call.1']
    #allocation4 [shape = 's32[1]{0}', space=sflag, size = 0x4, scoped, tag = 'scoped memory for tpu_custom_call.1']
    #allocation5 [shape = 'u8[8192]{0}', space=vmem, size = 0x2000, scoped, tag = 'input window, operand 1, single buffered']
    #allocation6 [shape = 's32[1]{0}', space=sflag, size = 0x4, scoped, tag = 'scoped memory for tpu_custom_call.1']
    #allocation7 [shape = 'u8[8192]{0}', space=vmem, size = 0x2000, scoped, tag = 'output window, operand 0, single buffered']
    %12 = vsyncpa [#allocation3], 0
    %13 = vsyncpa [#allocation6], 0
    %14 = vsyncpa [#allocation4], 0
    // Predicated region
    $region2: #{tpu_custom_call.1} parent=1 // pred_check
      _
    $region3: #{tpu_custom_call.1} parent=1 // pred_check_branch
      %16 = sbr.rel (0) target = $region5
    $region4: #{tpu_custom_call.1} parent=1 // pred_region
      %s18 = ssub.s32 128, 128
      %19 = vsyncadd [#allocation3], %s18
      %s20 = sshll.u32 [#allocation2], 4
      %s21 = int_to_ptr.vmem [resolvable:$true] %s20
      %26 = dma.hbm_to_vmem [thread:$0]  %s0, 128, %s21, [#allocation3], 64, 64, 4
    $region5: #{tpu_custom_call.1} parent=1 // pred_fallthru
      _
    // Predicated region
    $region6: #{tpu_custom_call.1} parent=1 // pred_check
      _
    $region7: #{tpu_custom_call.1} parent=1 // pred_check_branch
      %28 = sbr.rel (0) target = $region9
    $region8: #{tpu_custom_call.1} parent=1 // pred_region
      %s30 = ssub.s32 256, 256
      %31 = vsyncadd [#allocation6], %s30
      %s32 = sshll.u32 [#allocation5], 4
      %s33 = int_to_ptr.vmem [resolvable:$true] %s32
      %38 = dma.hbm_to_vmem [thread:$0]  %s1, 256, %s33, [#allocation6], 64, 64, 4
    $region9: #{tpu_custom_call.1} parent=1 // pred_fallthru
      _
    // Predicated region
    $region10: #{tpu_custom_call.1} parent=1 // pred_check
      _
    $region11: #{tpu_custom_call.1} parent=1 // pred_check_branch
      %40 = sbr.rel (0) target = $region13
    $region12: #{tpu_custom_call.1} parent=1 // pred_region
      _
    $region13: #{tpu_custom_call.1} parent=1 // pred_fallthru
      _
    // Predicated region
    $region14: #{tpu_custom_call.1} parent=1 // pred_check
      _
    $region15: #{tpu_custom_call.1} parent=1 // pred_check_branch
      %42 = sbr.rel (0) target = $region17
    $region16: #{tpu_custom_call.1} parent=1 // pred_region
      _
    $region17: #{tpu_custom_call.1} parent=1 // pred_fallthru
      _
    // Predicated region
    $region18: #{tpu_custom_call.1} parent=1 // pred_check
      _
    $region19: #{tpu_custom_call.1} parent=1 // pred_check_branch
      %44 = sbr.rel (0) target = $region21
    $region20: #{tpu_custom_call.1} parent=1 // pred_region
      _
    $region21: #{tpu_custom_call.1} parent=1 // pred_fallthru
      _
    // Predicated region
    $region22: #{tpu_custom_call.1} parent=1 // pred_check
      _
    $region23: #{tpu_custom_call.1} parent=1 // pred_check_branch
      %46 = sbr.rel (0) target = $region25
    $region24: #{tpu_custom_call.1} parent=1 // pred_region
      _
    $region25: #{tpu_custom_call.1} parent=1 // pred_fallthru
      _
    // Predicated region
    $region26: #{tpu_custom_call.1} parent=1 // pred_check
      _
    $region27: #{tpu_custom_call.1} parent=1 // pred_check_branch
      %48 = sbr.rel (0) target = $region29
    $region28: #{tpu_custom_call.1} parent=1 // pred_region
      _
    $region29: #{tpu_custom_call.1} parent=1 // pred_fallthru
      _
    // Predicated region
    $region30: #{tpu_custom_call.1} parent=1 // pred_check
      _
    $region31: #{tpu_custom_call.1} parent=1 // pred_check_branch
      %50 = sbr.rel (0) target = $region33
    $region32: #{tpu_custom_call.1} parent=1 // pred_region
      %51 = dma.done [#allocation3], 128
    $region33: #{tpu_custom_call.1} parent=1 // pred_fallthru
      _
    // Predicated region
    $region34: #{tpu_custom_call.1} parent=1 // pred_check
      _
    $region35: #{tpu_custom_call.1} parent=1 // pred_check_branch
      %53 = sbr.rel (0) target = $region37
    $region36: #{tpu_custom_call.1} parent=1 // pred_region
      %54 = dma.done [#allocation6], 256
    $region37: #{tpu_custom_call.1} parent=1 // pred_fallthru
      _
    %v56 = vld [vmem:[#allocation2] sm:$0xf]
    %v57 = vld [vmem:[#allocation2 + $0x4] sm:$0xf]
    %v58 = vld [vmem:[#allocation5] sm:$0xf]
    %v59 = vld [vmem:[#allocation5 + $0x4] sm:$0xf]
    %v60 = vld [vmem:[#allocation5 + $0x8] sm:$0xf]
    %v61 = vld [vmem:[#allocation5 + $0xc] sm:$0xf]
    %v62 = vld [vmem:[%s2] sm:$0x1]
    %v64 = vlaneseq
    %v65 = vshrl.u32 %v64, 7
    %v66 = vsub.s32 0, %v65
    %v67 = vrot.slane %v62, %v66
    %v71 = vunpack.c.l.b16 %v56
    %v72 = vunpack.c.l.b16 %v57
    %v73 = vpack.c.b16 %v72, %v71
    %v78 = vunpack.c.l.b16 %v58
    %v79 = vunpack.c.l.b16 %v59
    %v80 = vunpack.c.l.b16 %v60
    %v81 = vunpack.c.l.b16 %v61
    %v82 = vpack.c.b16 %v79, %v78
    %v83 = vpack.c.b16 %v81, %v80
    %vm86 = vcmask 261120
    %v88 = vsel %vm86, %v73, 0
    %90 = vmatprep.subr.bf16.mxu0 0
    %91 = vmatpush1.bf16.msra.mxu0 %v82
    %92 = vmatprep.subr.bf16.mxu0 0
    %93 = vmatpush1.bf16.msra.mxu0 %v83
    %94 = vmatprep.subr.bf16.mxu0 0
    %95 = vmatpush1.bf16.msra.mxu0 0
    %96 = vmatprep.subr.bf16.mxu0 0
    %97 = vmatpush1.bf16.msra.mxu0 0
    %98 = vmatprep.subr.bf16.mxu0 0
    %99 = vmatpush1.bf16.msra.mxu0 0
    %100 = vmatprep.subr.bf16.mxu0 0
    %101 = vmatpush1.bf16.msra.mxu0 0
    %102 = vmatprep.subr.bf16.mxu0 0
    %103 = vmatpush1.bf16.msra.mxu0 0
    %104 = vmatprep.subr.bf16.mxu0 0
    %105 = vmatpush1.bf16.msra.mxu0 0
    %106 = vmatprep.subr.bf16.mxu0 0
    %107 = vmatpush1.bf16.msra.mxu0 0
    %108 = vmatprep.subr.bf16.mxu0 0
    %109 = vmatpush1.bf16.msra.mxu0 0
    %110 = vmatprep.subr.bf16.mxu0 0
    %111 = vmatpush1.bf16.msra.mxu0 0
    %112 = vmatprep.subr.bf16.mxu0 0
    %113 = vmatpush1.bf16.msra.mxu0 0
    %114 = vmatprep.subr.bf16.mxu0 0
    %115 = vmatpush1.bf16.msra.mxu0 0
    %116 = vmatprep.subr.bf16.mxu0 0
    %117 = vmatpush1.bf16.msra.mxu0 0
    %118 = vmatprep.subr.bf16.mxu0 0
    %119 = vmatpush1.bf16.msra.mxu0 0
    %120 = vmatprep.subr.bf16.mxu0 0
    %121 = vmatpush1.bf16.msra.mxu0 0
    %122 = vmatprep.mubr.bf16.mxu0 0
    %123 = vmatmul.mubr.bf16.gmra.mrb[0].mxu0 %v88
    %v124 = vpop.f32.mrb[0].mxu0
    %v125 = vadd.f32 %v67, %v124
    %v126 = vpop.f32.mrb[0].mxu0
    %v127 = vpop.f32.mrb[0].mxu0
    %v128 = vadd.f32 %v67, %v127
    %v129 = vpop.f32.mrb[0].mxu0
    %130 = vdwg.mxu0
    %v131 = vsel %vm86, %v125, -inf
    %132 = vmax.xlane.f32.xlu0 %v131
    %v133 = vpop.xlane.xlu0 %132
    %v134 = vsel %vm86, %v128, -inf
    %135 = vmax.xlane.f32.xlu0 %v134
    %v136 = vpop.xlane.xlu0 %135
    %v137 = vsub.f32 %v125, %v133
    %v138 = vsub.f32 %v128, %v136
    %v139 = vmul.f32 %v137, 1.442695
    %v140 = vpow.pop %v139
    %v141 = vmul.f32 %v138, 1.442695
    %v142 = vpow.pop %v141
    %v143 = vld [vmem:[%s4] sm:$0xff]
    %v144 = vld [vmem:[%s4 + $0x8] sm:$0xff]
    %v145 = vld [vmem:[%s4 + $0x10] sm:$0xff]
    %v146 = vld [vmem:[%s4 + $0x18] sm:$0xff]
    %v148 = vsel %vm86, %v140, 0
    %v151 = vsel %vm86, %v142, 0
    %153 = vmatprep.subr.mxu0 0.0
    %154 = vmatpush1.msra.mxu0 %v143
    %155 = vmatprep.subr.mxu0 0.0
    %156 = vmatpush1.msra.mxu0 %v144
    %157 = vmatprep.subr.mxu0 0.0
    %158 = vmatpush1.msra.mxu0 %v145
    %159 = vmatprep.subr.mxu0 0.0
    %160 = vmatpush1.msra.mxu0 %v146
    %161 = vmatprep.subr.mxu0 0.0
    %162 = vmatpush1.msra.mxu0 0.0
    %163 = vmatprep.subr.mxu0 0.0
    %164 = vmatpush1.msra.mxu0 0.0
    %165 = vmatprep.subr.mxu0 0.0
    %166 = vmatpush1.msra.mxu0 0.0
    %167 = vmatprep.subr.mxu0 0.0
    %168 = vmatpush1.msra.mxu0 0.0
    %169 = vmatprep.subr.mxu0 0.0
    %170 = vmatpush1.msra.mxu0 0.0
    %171 = vmatprep.subr.mxu0 0.0
    %172 = vmatpush1.msra.mxu0 0.0
    %173 = vmatprep.subr.mxu0 0.0
    %174 = vmatpush1.msra.mxu0 0.0
    %175 = vmatprep.subr.mxu0 0.0
    %176 = vmatpush1.msra.mxu0 0.0
    %177 = vmatprep.subr.mxu0 0.0
    %178 = vmatpush1.msra.mxu0 0.0
    %179 = vmatprep.subr.mxu0 0.0
    %180 = vmatpush1.msra.mxu0 0.0
    %181 = vmatprep.subr.mxu0 0.0
    %182 = vmatpush1.msra.mxu0 0.0
    %183 = vmatprep.subr.mxu0 0.0
    %184 = vmatpush1.msra.mxu0 0.0
    %185 = vmatprep.subr.mxu0 0.0
    %186 = vmatpush1.msra.mxu0 0.0
    %187 = vmatprep.subr.mxu0 0.0
    %188 = vmatpush1.msra.mxu0 0.0
    %189 = vmatprep.subr.mxu0 0.0
    %190 = vmatpush1.msra.mxu0 0.0
    %191 = vmatprep.subr.mxu0 0.0
    %192 = vmatpush1.msra.mxu0 0.0
    %193 = vmatprep.subr.mxu0 0.0
    %194 = vmatpush1.msra.mxu0 0.0
    %195 = vmatprep.subr.mxu0 0.0
    %196 = vmatpush1.msra.mxu0 0.0
    %197 = vmatprep.subr.mxu0 0.0
    %198 = vmatpush1.msra.mxu0 0.0
    %199 = vmatprep.subr.mxu0 0.0
    %200 = vmatpush1.msra.mxu0 0.0
    %201 = vmatprep.subr.mxu0 0.0
    %202 = vmatpush1.msra.mxu0 0.0
    %203 = vmatprep.subr.mxu0 0.0
    %204 = vmatpush1.msra.mxu0 0.0
    %205 = vmatprep.subr.mxu0 0.0
    %206 = vmatpush1.msra.mxu0 0.0
    %207 = vmatprep.subr.mxu0 0.0
    %208 = vmatpush1.msra.mxu0 0.0
    %209 = vmatprep.subr.mxu0 0.0
    %210 = vmatpush1.msra.mxu0 0.0
    %211 = vmatprep.subr.mxu0 0.0
    %212 = vmatpush1.msra.mxu0 0.0
    %213 = vmatprep.subr.mxu0 0.0
    %214 = vmatpush1.msra.mxu0 0.0
    %215 = vmatprep.subr.mxu0 0.0
    %216 = vmatpush1.msra.mxu0 0.0
    %217 = vmatprep.mubr.f32.mxu0 0.0
    %218 = vmatmul.mubr.f32.gmra.mrb[0].mxu0 %v148
    %v219 = vpop.f32.mrb[0].mxu0
    %v220 = vadd.f32 0.0, %v219
    %v221 = vpop.f32.mrb[0].mxu0
    %222 = vmatprep.mubr.f32.mxu0 0.0
    %223 = vmatmul.mubr.f32.gmra.mrb[0].mxu0 %v151
    %v224 = vpop.f32.mrb[0].mxu0
    %v225 = vadd.f32 0.0, %v224
    %v226 = vpop.f32.mrb[0].mxu0
    %227 = vdwg.mxu0
    %v228 = vmax.f32 %v220, 1e-30
    %v229 = vmax.f32 %v225, 1e-30
    %v230 = vrcp.pop %v228
    %v231 = vrcp.pop %v229
    %v232 = vmul.f32 %v230, 0.59460354
    %v233 = vmul.f32 %v231, 0.59460354
    %v234 = vld [vmem:[%s5] sm:$0xf]
    %vm235 = vcmask 31744
    %v237 = vsel %vm235, %v232, 0
    %v240 = vsel %vm235, %v233, 0
    %vm242 = vcmask 1043456
    %v244 = vsel %vm242, %v234, 0
    %246 = vmatprep.subr.mxu0 0.0
    %247 = vmatpush1.msra.mxu0 %v244
    %248 = vmatprep.subr.mxu0 0.0
    %249 = vmatpush1.msra.mxu0 0.0
    %250 = vmatprep.subr.mxu0 0.0
    %251 = vmatpush1.msra.mxu0 0.0
    %252 = vmatprep.subr.mxu0 0.0
    %253 = vmatpush1.msra.mxu0 0.0
    %254 = vmatprep.subr.mxu0 0.0
    %255 = vmatpush1.msra.mxu0 0.0
    %256 = vmatprep.subr.mxu0 0.0
    %257 = vmatpush1.msra.mxu0 0.0
    %258 = vmatprep.subr.mxu0 0.0
    %259 = vmatpush1.msra.mxu0 0.0
    %260 = vmatprep.subr.mxu0 0.0
    %261 = vmatpush1.msra.mxu0 0.0
    %262 = vmatprep.subr.mxu0 0.0
    %263 = vmatpush1.msra.mxu0 0.0
    %264 = vmatprep.subr.mxu0 0.0
    %265 = vmatpush1.msra.mxu0 0.0
    %266 = vmatprep.subr.mxu0 0.0
    %267 = vmatpush1.msra.mxu0 0.0
    %268 = vmatprep.subr.mxu0 0.0
    %269 = vmatpush1.msra.mxu0 0.0
    %270 = vmatprep.subr.mxu0 0.0
    %271 = vmatpush1.msra.mxu0 0.0
    %272 = vmatprep.subr.mxu0 0.0
    %273 = vmatpush1.msra.mxu0 0.0
    %274 = vmatprep.subr.mxu0 0.0
    %275 = vmatpush1.msra.mxu0 0.0
    %276 = vmatprep.subr.mxu0 0.0
    %277 = vmatpush1.msra.mxu0 0.0
    %278 = vmatprep.subr.mxu0 0.0
    %279 = vmatpush1.msra.mxu0 0.0
    %280 = vmatprep.subr.mxu0 0.0
    %281 = vmatpush1.msra.mxu0 0.0
    %282 = vmatprep.subr.mxu0 0.0
    %283 = vmatpush1.msra.mxu0 0.0
    %284 = vmatprep.subr.mxu0 0.0
    %285 = vmatpush1.msra.mxu0 0.0
    %286 = vmatprep.subr.mxu0 0.0
    %287 = vmatpush1.msra.mxu0 0.0
    %288 = vmatprep.subr.mxu0 0.0
    %289 = vmatpush1.msra.mxu0 0.0
    %290 = vmatprep.subr.mxu0 0.0
    %291 = vmatpush1.msra.mxu0 0.0
    %292 = vmatprep.subr.mxu0 0.0
    %293 = vmatpush1.msra.mxu0 0.0
    %294 = vmatprep.subr.mxu0 0.0
    %295 = vmatpush1.msra.mxu0 0.0
    %296 = vmatprep.subr.mxu0 0.0
    %297 = vmatpush1.msra.mxu0 0.0
    %298 = vmatprep.subr.mxu0 0.0
    %299 = vmatpush1.msra.mxu0 0.0
    %300 = vmatprep.subr.mxu0 0.0
    %301 = vmatpush1.msra.mxu0 0.0
    %302 = vmatprep.subr.mxu0 0.0
    %303 = vmatpush1.msra.mxu0 0.0
    %304 = vmatprep.subr.mxu0 0.0
    %305 = vmatpush1.msra.mxu0 0.0
    %306 = vmatprep.subr.mxu0 0.0
    %307 = vmatpush1.msra.mxu0 0.0
    %308 = vmatprep.subr.mxu0 0.0
    %309 = vmatpush1.msra.mxu0 0.0
    %310 = vmatprep.mubr.f32.mxu0 0.0
    %311 = vmatmul.mubr.f32.gmra.mrb[0].mxu0 %v237
    %v312 = vpop.f32.mrb[0].mxu0
    %v313 = vadd.f32 0.0, %v312
    %v314 = vpop.f32.mrb[0].mxu0
    %315 = vmatprep.mubr.f32.mxu0 0.0
    %316 = vmatmul.mubr.f32.gmra.mrb[0].mxu0 %v240
    %v317 = vpop.f32.mrb[0].mxu0
    %v318 = vadd.f32 0.0, %v317
    %v319 = vpop.f32.mrb[0].mxu0
    %320 = vdwg.mxu0
    %v321 = vmul.f32 %v140, %v313
    %v322 = vmul.f32 %v142, %v318
    %v323 = vpack.c.bf16 %v125, %v125
    %v324 = vpack.c.bf16 %v128, %v128
    %v325 = vld [vmem:[%s3] sm:$0xff]
    %v326 = vld [vmem:[%s3 + $0x8] sm:$0xff]
    %v327 = vld [vmem:[%s3 + $0x10] sm:$0xff]
    %v328 = vld [vmem:[%s3 + $0x18] sm:$0xff]
    %330 = vrot.lane.b32.xlu0 %v323, 96
    %v331 = vpop.permute.xlu0 %330
    %333 = vxpose.xlu0.c.b16.start [1/8] %v331, 128
    %334 = vxpose.xlu0.c.b16.cont [2/8] 0, 128
    %335 = vxpose.xlu0.c.b16.cont [3/8] 0, 128
    %336 = vxpose.xlu0.c.b16.cont [4/8] 0, 128
    %337 = vxpose.xlu0.c.b16.cont [5/8] 0, 128
    %338 = vxpose.xlu0.c.b16.cont [6/8] 0, 128
    %339 = vxpose.xlu0.c.b16.cont [7/8] 0, 128
    %340 = vxpose.xlu0.c.b16.end [8/8] 0, 128
    %v341 = vpop.trf.xlu0
    %v342 = vpop.trf.xlu0
    %v343 = vpop.trf.xlu0
    %v344 = vpop.trf.xlu0
    %v345 = vpop.trf.xlu0
    %v346 = vpop.trf.xlu0
    %v347 = vpop.trf.xlu0
    %v348 = vpop.trf.xlu0
    %349 = vrot.lane.b32.xlu0 %v323, 64
    %v350 = vpop.permute.xlu0 %349
    %vm351 = vcmask 64512
    %v353 = vsel %vm351, %v341, 0
    %v356 = vsel %vm351, %v342, 0
    %v359 = vsel %vm242, %v350, 0
    %361 = vmatprep.subr.bf16.mxu0 0
    %362 = vmatpush1.bf16.msra.mxu0 %v359
    %363 = vmatprep.subr.bf16.mxu0 0
    %364 = vmatpush1.bf16.msra.mxu0 0
    %365 = vmatprep.subr.bf16.mxu0 0
    %366 = vmatpush1.bf16.msra.mxu0 0
    %367 = vmatprep.subr.bf16.mxu0 0
    %368 = vmatpush1.bf16.msra.mxu0 0
    %369 = vmatprep.subr.bf16.mxu0 0
    %370 = vmatpush1.bf16.msra.mxu0 0
    %371 = vmatprep.subr.bf16.mxu0 0
    %372 = vmatpush1.bf16.msra.mxu0 0
    %373 = vmatprep.subr.bf16.mxu0 0
    %374 = vmatpush1.bf16.msra.mxu0 0
    %375 = vmatprep.subr.bf16.mxu0 0
    %376 = vmatpush1.bf16.msra.mxu0 0
    %377 = vmatprep.subr.bf16.mxu0 0
    %378 = vmatpush1.bf16.msra.mxu0 0
    %379 = vmatprep.subr.bf16.mxu0 0
    %380 = vmatpush1.bf16.msra.mxu0 0
    %381 = vmatprep.subr.bf16.mxu0 0
    %382 = vmatpush1.bf16.msra.mxu0 0
    %383 = vmatprep.subr.bf16.mxu0 0
    %384 = vmatpush1.bf16.msra.mxu0 0
    %385 = vmatprep.subr.bf16.mxu0 0
    %386 = vmatpush1.bf16.msra.mxu0 0
    %387 = vmatprep.subr.bf16.mxu0 0
    %388 = vmatpush1.bf16.msra.mxu0 0
    %389 = vmatprep.subr.bf16.mxu0 0
    %390 = vmatpush1.bf16.msra.mxu0 0
    %391 = vmatprep.subr.bf16.mxu0 0
    %392 = vmatpush1.bf16.msra.mxu0 0
    %393 = vmatprep.mubr.bf16.mxu0 0
    %394 = vmatmul.mubr.bf16.gmra.mrb[0].mxu0 %v353
    %v395 = vpop.f32.mrb[0].mxu0
    %v396 = vadd.f32 %v325, %v395
    %v397 = vpop.f32.mrb[0].mxu0
    %v398 = vpop.f32.mrb[0].mxu0
    %v399 = vadd.f32 %v326, %v398
    %v400 = vpop.f32.mrb[0].mxu0
    %401 = vmatprep.mubr.bf16.mxu0 0
    %402 = vmatmul.mubr.bf16.gmra.mrb[0].mxu0 %v356
    %v403 = vpop.f32.mrb[0].mxu0
    %v404 = vadd.f32 %v327, %v403
    %v405 = vpop.f32.mrb[0].mxu0
    %v406 = vpop.f32.mrb[0].mxu0
    %v407 = vadd.f32 %v328, %v406
    %v408 = vpop.f32.mrb[0].mxu0
    %409 = vdwg.mxu0
    %411 = vrot.lane.b32.xlu0 %v324, 96
    %v412 = vpop.permute.xlu0 %411
    %414 = vxpose.xlu0.c.b16.start [1/8] %v412, 128
    %415 = vxpose.xlu0.c.b16.cont [2/8] 0, 128
    %416 = vxpose.xlu0.c.b16.cont [3/8] 0, 128
    %417 = vxpose.xlu0.c.b16.cont [4/8] 0, 128
    %418 = vxpose.xlu0.c.b16.cont [5/8] 0, 128
    %419 = vxpose.xlu0.c.b16.cont [6/8] 0, 128
    %420 = vxpose.xlu0.c.b16.cont [7/8] 0, 128
    %421 = vxpose.xlu0.c.b16.end [8/8] 0, 128
    %v422 = vpop.trf.xlu0
    %v423 = vpop.trf.xlu0
    %v424 = vpop.trf.xlu0
    %v425 = vpop.trf.xlu0
    %v426 = vpop.trf.xlu0
    %v427 = vpop.trf.xlu0
    %v428 = vpop.trf.xlu0
    %v429 = vpop.trf.xlu0
    %430 = vrot.lane.b32.xlu0 %v324, 64
    %v431 = vpop.permute.xlu0 %430
    %v433 = vsel %vm351, %v422, 0
    %v436 = vsel %vm351, %v423, 0
    %v439 = vsel %vm242, %v431, 0
    %441 = vmatprep.subr.bf16.mxu0 0
    %442 = vmatpush1.bf16.msra.mxu0 %v439
    %443 = vmatprep.subr.bf16.mxu0 0
    %444 = vmatpush1.bf16.msra.mxu0 0
    %445 = vmatprep.subr.bf16.mxu0 0
    %446 = vmatpush1.bf16.msra.mxu0 0
    %447 = vmatprep.subr.bf16.mxu0 0
    %448 = vmatpush1.bf16.msra.mxu0 0
    %449 = vmatprep.subr.bf16.mxu0 0
    %450 = vmatpush1.bf16.msra.mxu0 0
    %451 = vmatprep.subr.bf16.mxu0 0
    %452 = vmatpush1.bf16.msra.mxu0 0
    %453 = vmatprep.subr.bf16.mxu0 0
    %454 = vmatpush1.bf16.msra.mxu0 0
    %455 = vmatprep.subr.bf16.mxu0 0
    %456 = vmatpush1.bf16.msra.mxu0 0
    %457 = vmatprep.subr.bf16.mxu0 0
    %458 = vmatpush1.bf16.msra.mxu0 0
    %459 = vmatprep.subr.bf16.mxu0 0
    %460 = vmatpush1.bf16.msra.mxu0 0
    %461 = vmatprep.subr.bf16.mxu0 0
    %462 = vmatpush1.bf16.msra.mxu0 0
    %463 = vmatprep.subr.bf16.mxu0 0
    %464 = vmatpush1.bf16.msra.mxu0 0
    %465 = vmatprep.subr.bf16.mxu0 0
    %466 = vmatpush1.bf16.msra.mxu0 0
    %467 = vmatprep.subr.bf16.mxu0 0
    %468 = vmatpush1.bf16.msra.mxu0 0
    %469 = vmatprep.subr.bf16.mxu0 0
    %470 = vmatpush1.bf16.msra.mxu0 0
    %471 = vmatprep.subr.bf16.mxu0 0
    %472 = vmatpush1.bf16.msra.mxu0 0
    %473 = vmatprep.mubr.bf16.mxu0 0
    %474 = vmatmul.mubr.bf16.gmra.mrb[0].mxu0 %v433
    %v475 = vpop.f32.mrb[0].mxu0
    %v476 = vadd.f32 %v325, %v475
    %v477 = vpop.f32.mrb[0].mxu0
    %v478 = vpop.f32.mrb[0].mxu0
    %v479 = vadd.f32 %v326, %v478
    %v480 = vpop.f32.mrb[0].mxu0
    %481 = vmatprep.mubr.bf16.mxu0 0
    %482 = vmatmul.mubr.bf16.gmra.mrb[0].mxu0 %v436
    %v483 = vpop.f32.mrb[0].mxu0
    %v484 = vadd.f32 %v327, %v483
    %v485 = vpop.f32.mrb[0].mxu0
    %v486 = vpop.f32.mrb[0].mxu0
    %v487 = vadd.f32 %v328, %v486
    %v488 = vpop.f32.mrb[0].mxu0
    %489 = vdwg.mxu0
    %v490 = vsel %vm86, %v396, -inf
    %v491 = vsel %vm86, %v399, -inf
    %v492 = vsel %vm86, %v404, -inf
    %v493 = vmax.f32 %v490, %v492
    %v494 = vsel %vm86, %v407, -inf
    %v495 = vmax.f32 %v491, %v494
    %v496 = vmax.f32 %v493, %v495
    %v497 = vrot.slane %v496, 4
    %v498 = vmax.f32 %v496, %v497
    %v499 = vrot.slane %v498, 2
    %v500 = vmax.f32 %v498, %v499
    %v501 = vrot.slane %v500, 1
    %v502 = vmax.f32 %v500, %v501
    %v503 = vsel %vm86, %v476, -inf
    %v504 = vsel %vm86, %v479, -inf
    %v505 = vsel %vm86, %v484, -inf
    %v506 = vmax.f32 %v503, %v505
    %v507 = vsel %vm86, %v487, -inf
    %v508 = vmax.f32 %v504, %v507
    %v509 = vmax.f32 %v506, %v508
    %v510 = vrot.slane %v509, 4
    %v511 = vmax.f32 %v509, %v510
    %v512 = vrot.slane %v511, 2
    %v513 = vmax.f32 %v511, %v512
    %v514 = vrot.slane %v513, 1
    %v515 = vmax.f32 %v513, %v514
    %v516 = vsub.f32 %v396, %v502
    %v517 = vsub.f32 %v399, %v502
    %v518 = vsub.f32 %v404, %v502
    %v519 = vsub.f32 %v407, %v502
    %v520 = vsub.f32 %v476, %v515
    %v521 = vsub.f32 %v479, %v515
    %v522 = vsub.f32 %v484, %v515
    %v523 = vsub.f32 %v487, %v515
    %v524 = vmul.f32 %v516, 1.442695
    %v525 = vpow.pop %v524
    %v526 = vmul.f32 %v517, 1.442695
    %v527 = vpow.pop %v526
    %v528 = vmul.f32 %v518, 1.442695
    %v529 = vpow.pop %v528
    %v530 = vmul.f32 %v519, 1.442695
    %v531 = vpow.pop %v530
    %v532 = vmul.f32 %v520, 1.442695
    %v533 = vpow.pop %v532
    %v534 = vmul.f32 %v521, 1.442695
    %v535 = vpow.pop %v534
    %v536 = vmul.f32 %v522, 1.442695
    %v537 = vpow.pop %v536
    %v538 = vmul.f32 %v523, 1.442695
    %v539 = vpow.pop %v538
    %v540 = vsel %vm86, %v525, 0.0
    %v541 = vsel %vm86, %v527, 0.0
    %v542 = vadd.f32 %v540, %v541
    %v543 = vsel %vm86, %v529, 0.0
    %v544 = vadd.f32 %v542, %v543
    %v545 = vsel %vm86, %v531, 0.0
    %v546 = vadd.f32 %v544, %v545
    %v547 = vrot.slane %v546, 4
    %v548 = vadd.f32 %v546, %v547
    %v549 = vrot.slane %v548, 2
    %v550 = vadd.f32 %v548, %v549
    %v551 = vrot.slane %v550, 1
    %v552 = vadd.f32 %v550, %v551
    %v553 = vsel %vm86, %v533, 0.0
    %v554 = vsel %vm86, %v535, 0.0
    %v555 = vadd.f32 %v553, %v554
    %v556 = vsel %vm86, %v537, 0.0
    %v557 = vadd.f32 %v555, %v556
    %v558 = vsel %vm86, %v539, 0.0
    %v559 = vadd.f32 %v557, %v558
    %v560 = vrot.slane %v559, 4
    %v561 = vadd.f32 %v559, %v560
    %v562 = vrot.slane %v561, 2
    %v563 = vadd.f32 %v561, %v562
    %v564 = vrot.slane %v563, 1
    %v565 = vadd.f32 %v563, %v564
    %v566 = vrcp.pop %v552
    %v567 = vrcp.pop %v565
    %v568 = vmul.f32 %v525, %v566
    %v569 = vmul.f32 %v527, %v566
    %v570 = vmul.f32 %v529, %v566
    %v571 = vmul.f32 %v531, %v566
    %v572 = vmul.f32 %v533, %v567
    %v573 = vmul.f32 %v535, %v567
    %v574 = vmul.f32 %v537, %v567
    %v575 = vmul.f32 %v539, %v567
    %v576 = vpack.c.bf16 %v321, %v321
    %v577 = vpack.c.bf16 %v322, %v322
    %v578 = vpack.c.bf16 %v569, %v568
    %v579 = vpack.c.bf16 %v571, %v570
    %v580 = vpack.c.bf16 %v573, %v572
    %v581 = vpack.c.bf16 %v575, %v574
    %v583 = vsel %vm86, %v576, 0
    %585 = vmatprep.subr.bf16.mxu0 0
    %586 = vmatpush1.bf16.msra.mxu0 %v578
    %587 = vmatprep.subr.bf16.mxu0 0
    %588 = vmatpush1.bf16.msra.mxu0 %v579
    %589 = vmatprep.subr.bf16.mxu0 0
    %590 = vmatpush1.bf16.msra.mxu0 0
    %591 = vmatprep.subr.bf16.mxu0 0
    %592 = vmatpush1.bf16.msra.mxu0 0
    %593 = vmatprep.subr.bf16.mxu0 0
    %594 = vmatpush1.bf16.msra.mxu0 0
    %595 = vmatprep.subr.bf16.mxu0 0
    %596 = vmatpush1.bf16.msra.mxu0 0
    %597 = vmatprep.subr.bf16.mxu0 0
    %598 = vmatpush1.bf16.msra.mxu0 0
    %599 = vmatprep.subr.bf16.mxu0 0
    %600 = vmatpush1.bf16.msra.mxu0 0
    %601 = vmatprep.subr.bf16.mxu0 0
    %602 = vmatpush1.bf16.msra.mxu0 0
    %603 = vmatprep.subr.bf16.mxu0 0
    %604 = vmatpush1.bf16.msra.mxu0 0
    %605 = vmatprep.subr.bf16.mxu0 0
    %606 = vmatpush1.bf16.msra.mxu0 0
    %607 = vmatprep.subr.bf16.mxu0 0
    %608 = vmatpush1.bf16.msra.mxu0 0
    %609 = vmatprep.subr.bf16.mxu0 0
    %610 = vmatpush1.bf16.msra.mxu0 0
    %611 = vmatprep.subr.bf16.mxu0 0
    %612 = vmatpush1.bf16.msra.mxu0 0
    %613 = vmatprep.subr.bf16.mxu0 0
    %614 = vmatpush1.bf16.msra.mxu0 0
    %615 = vmatprep.subr.bf16.mxu0 0
    %616 = vmatpush1.bf16.msra.mxu0 0
    %617 = vmatprep.mubr.bf16.mxu0 0
    %618 = vmatmul.mubr.bf16.gmra.mrb[0].mxu0 %v583
    %v619 = vpop.f32.mrb[0].mxu0
    %v620 = vadd.f32 0.0, %v619
    %v621 = vpop.f32.mrb[0].mxu0
    %v622 = vpop.f32.mrb[0].mxu0
    %v623 = vpop.f32.mrb[0].mxu0
    %624 = vdwg.mxu0
    %v626 = vsel %vm86, %v577, 0
    %628 = vmatprep.subr.bf16.mxu0 0
    %629 = vmatpush1.bf16.msra.mxu0 %v580
    %630 = vmatprep.subr.bf16.mxu0 0
    %631 = vmatpush1.bf16.msra.mxu0 %v581
    %632 = vmatprep.subr.bf16.mxu0 0
    %633 = vmatpush1.bf16.msra.mxu0 0
    %634 = vmatprep.subr.bf16.mxu0 0
    %635 = vmatpush1.bf16.msra.mxu0 0
    %636 = vmatprep.subr.bf16.mxu0 0
    %637 = vmatpush1.bf16.msra.mxu0 0
    %638 = vmatprep.subr.bf16.mxu0 0
    %639 = vmatpush1.bf16.msra.mxu0 0
    %640 = vmatprep.subr.bf16.mxu0 0
    %641 = vmatpush1.bf16.msra.mxu0 0
    %642 = vmatprep.subr.bf16.mxu0 0
    %643 = vmatpush1.bf16.msra.mxu0 0
    %644 = vmatprep.subr.bf16.mxu0 0
    %645 = vmatpush1.bf16.msra.mxu0 0
    %646 = vmatprep.subr.bf16.mxu0 0
    %647 = vmatpush1.bf16.msra.mxu0 0
    %648 = vmatprep.subr.bf16.mxu0 0
    %649 = vmatpush1.bf16.msra.mxu0 0
    %650 = vmatprep.subr.bf16.mxu0 0
    %651 = vmatpush1.bf16.msra.mxu0 0
    %652 = vmatprep.subr.bf16.mxu0 0
    %653 = vmatpush1.bf16.msra.mxu0 0
    %654 = vmatprep.subr.bf16.mxu0 0
    %655 = vmatpush1.bf16.msra.mxu0 0
    %656 = vmatprep.subr.bf16.mxu0 0
    %657 = vmatpush1.bf16.msra.mxu0 0
    %658 = vmatprep.subr.bf16.mxu0 0
    %659 = vmatpush1.bf16.msra.mxu0 0
    %660 = vmatprep.mubr.bf16.mxu0 0
    %661 = vmatmul.mubr.bf16.gmra.mrb[0].mxu0 %v626
    %v662 = vpop.f32.mrb[0].mxu0
    %v663 = vadd.f32 0.0, %v662
    %v664 = vpop.f32.mrb[0].mxu0
    %v665 = vpop.f32.mrb[0].mxu0
    %v666 = vpop.f32.mrb[0].mxu0
    %667 = vdwg.mxu0
    %v668 = vpack.c.bf16 %v663, %v620
    %v669 = vld [vmem:[%s6] sm:$0xf]
    %v670 = vld [vmem:[%s6 + $0x4] sm:$0xf]
    %v671 = vld [vmem:[%s6 + $0x8] sm:$0xf]
    %v672 = vld [vmem:[%s6 + $0xc] sm:$0xf]
    %v677 = vunpack.c.l.b16 %v669
    %v678 = vunpack.c.l.b16 %v670
    %v679 = vunpack.c.l.b16 %v671
    %v680 = vunpack.c.l.b16 %v672
    %v681 = vpack.c.b16 %v678, %v677
    %v682 = vpack.c.b16 %v680, %v679
    %v686 = vsel %vm86, %v668, 0
    %688 = vmatprep.subr.bf16.mxu0 0
    %689 = vmatpush1.bf16.msra.mxu0 %v681
    %690 = vmatprep.subr.bf16.mxu0 0
    %691 = vmatpush1.bf16.msra.mxu0 %v682
    %692 = vmatprep.subr.bf16.mxu0 0
    %693 = vmatpush1.bf16.msra.mxu0 0
    %694 = vmatprep.subr.bf16.mxu0 0
    %695 = vmatpush1.bf16.msra.mxu0 0
    %696 = vmatprep.subr.bf16.mxu0 0
    %697 = vmatpush1.bf16.msra.mxu0 0
    %698 = vmatprep.subr.bf16.mxu0 0
    %699 = vmatpush1.bf16.msra.mxu0 0
    %700 = vmatprep.subr.bf16.mxu0 0
    %701 = vmatpush1.bf16.msra.mxu0 0
    %702 = vmatprep.subr.bf16.mxu0 0
    %703 = vmatpush1.bf16.msra.mxu0 0
    %704 = vmatprep.subr.bf16.mxu0 0
    %705 = vmatpush1.bf16.msra.mxu0 0
    %706 = vmatprep.subr.bf16.mxu0 0
    %707 = vmatpush1.bf16.msra.mxu0 0
    %708 = vmatprep.subr.bf16.mxu0 0
    %709 = vmatpush1.bf16.msra.mxu0 0
    %710 = vmatprep.subr.bf16.mxu0 0
    %711 = vmatpush1.bf16.msra.mxu0 0
    %712 = vmatprep.subr.bf16.mxu0 0
    %713 = vmatpush1.bf16.msra.mxu0 0
    %714 = vmatprep.subr.bf16.mxu0 0
    %715 = vmatpush1.bf16.msra.mxu0 0
    %716 = vmatprep.subr.bf16.mxu0 0
    %717 = vmatpush1.bf16.msra.mxu0 0
    %718 = vmatprep.subr.bf16.mxu0 0
    %719 = vmatpush1.bf16.msra.mxu0 0
    %720 = vmatprep.mubr.bf16.mxu0 0
    %721 = vmatmul.mubr.bf16.gmra.mrb[0].mxu0 %v686
    %v722 = vpop.f32.mrb[0].mxu0
    %v723 = vadd.f32 0.0, %v722
    %v724 = vpop.f32.mrb[0].mxu0
    %v725 = vpop.f32.mrb[0].mxu0
    %v726 = vadd.f32 0.0, %v725
    %v727 = vpop.f32.mrb[0].mxu0
    %728 = vdwg.mxu0
    %729 = vst.msk [vmem:[#allocation7] sm:$0xff] %vm86, %v723
    %730 = vst.msk [vmem:[#allocation7 + $0x8] sm:$0xff] %vm86, %v726
    // Predicated region
    $region38: #{tpu_custom_call.1} parent=1 // pred_check
      _
    $region39: #{tpu_custom_call.1} parent=1 // pred_check_branch
      %732 = sbr.rel (0) target = $region41
    $region40: #{tpu_custom_call.1} parent=1 // pred_region
      %s734 = ssub.s32 256, 256
      %735 = vsyncadd [#allocation4], %s734
      %s736 = sshll.u32 [#allocation7], 4
      %s737 = int_to_ptr.vmem [resolvable:$true] %s736
      %742 = dma.vmem_to_hbm [thread:$0]  %s737, 256, %s7, [#allocation4], 128, 128, 8
    $region41: #{tpu_custom_call.1} parent=1 // pred_fallthru
      _
    // Predicated region
    $region42: #{tpu_custom_call.1} parent=1 // pred_check
      _
    $region43: #{tpu_custom_call.1} parent=1 // pred_check_branch
      %744 = sbr.rel (0) target = $region45
    $region44: #{tpu_custom_call.1} parent=1 // pred_region
      %745 = dma.done [#allocation4], 256
    $region45: #{tpu_custom_call.1} parent=1 // pred_fallthru
      _
    %746 = vsyncpa [#allocation3], 1
    %747 = vsyncpa [#allocation6], 1
    %748 = vsyncpa [#allocation4], 1

// kernel: tpu_custom_call.1
$region0: #{tpu_custom_call.1}
  #allocation0 [shape = 'u32[]', space=smem, size = 0x4, offset = 0x4, fixed_abs, tag = 'smem constant byte address 0x4 - core index']
  #allocation1 [shape = 'u32[144,128]{1,0:T(1,128)}', space=vmem, size = 0x12000, scoped, tag = 'internal scratch']
  %s0 = inlined_call_operand.hbm [shape: bf16[16,32], index: 0, kind: input, shape index: {}]
  %s1 = inlined_call_operand.hbm [shape: bf16[32,96], index: 1, kind: input, shape index: {}]
  %s2 = inlined_call_operand.vmem [shape: f32[1,96], index: 2, kind: input, shape index: {}]
  %s3 = inlined_call_operand.vmem [shape: f32[32,32], index: 3, kind: input, shape index: {}]
  %s4 = inlined_call_operand.vmem [shape: f32[32,4], index: 4, kind: input, shape index: {}]
  %s5 = inlined_call_operand.vmem [shape: f32[4,32], index: 5, kind: input, shape index: {}]
  %s6 = inlined_call_operand.vmem [shape: bf16[32,32], index: 6, kind: input, shape index: {}]
  %s7 = inlined_call_operand.hbm [shape: f32[16,32], index: 7, kind: output, shape index: {}]
  %s8 = sld [smem:[#allocation0]]
  $region46: #{tpu_custom_call.1} parent=0
    _
  %s10 = ssub.s32 1, %s8
  %s11 = scalar_select 0, %s10, %s8
  $region1: #{tpu_custom_call.1} parent=0
    #allocation2 [shape = 'u8[4096]{0}', space=vmem, size = 0x1000, scoped, tag = 'input window, operand 0, single buffered']
    #allocation3 [shape = 's32[1]{0}', space=sflag, size = 0x4, scoped, tag = 'scoped memory for tpu_custom_call.1']
    #allocation4 [shape = 's32[1]{0}', space=sflag, size = 0x4, scoped, tag = 'scoped memory for tpu_custom_call.1']
    #allocation5 [shape = 'u8[8192]{0}', space=vmem, size = 0x2000, scoped, tag = 'input window, operand 1, single buffered']
    #allocation6 [shape = 's32[1]{0}', space=sflag, size = 0x4, scoped, tag = 'scoped memory for tpu_custom_call.1']
    #allocation7 [shape = 'u8[8192]{0}', space=vmem, size = 0x2000, scoped, tag = 'output window, operand 0, single buffered']
    %12 = vsyncpa [#allocation3], 0
    %13 = vsyncpa [#allocation6], 0
    %14 = vsyncpa [#allocation4], 0
    // Predicated region
    $region2: #{tpu_custom_call.1} parent=1 // pred_check
      _
    $region3: #{tpu_custom_call.1} parent=1 // pred_check_branch
      %16 = sbr.rel (0) target = $region5
    $region4: #{tpu_custom_call.1} parent=1 // pred_region
      %s18 = ssub.s32 128, 128
      %19 = vsyncadd [#allocation3], %s18
      %s20 = sshll.u32 [#allocation2], 4
      %s21 = int_to_ptr.vmem [resolvable:$true] %s20
      %26 = dma.hbm_to_vmem [thread:$0]  %s0, 128, %s21, [#allocation3], 64, 64, 4
    $region5: #{tpu_custom_call.1} parent=1 // pred_fallthru
      _
    // Predicated region
    $region6: #{tpu_custom_call.1} parent=1 // pred_check
      _
    $region7: #{tpu_custom_call.1} parent=1 // pred_check_branch
      %28 = sbr.rel (0) target = $region9
    $region8: #{tpu_custom_call.1} parent=1 // pred_region
      %s30 = ssub.s32 256, 256
      %31 = vsyncadd [#allocation6], %s30
      %s32 = sshll.u32 [#allocation5], 4
      %s33 = int_to_ptr.vmem [resolvable:$true] %s32
      %38 = dma.hbm_to_vmem [thread:$0]  %s1, 256, %s33, [#allocation6], 64, 64, 4
    $region9: #{tpu_custom_call.1} parent=1 // pred_fallthru
      _
    // Predicated region
    $region10: #{tpu_custom_call.1} parent=1 // pred_check
      _
    $region11: #{tpu_custom_call.1} parent=1 // pred_check_branch
      %40 = sbr.rel (0) target = $region13
    $region12: #{tpu_custom_call.1} parent=1 // pred_region
      _
    $region13: #{tpu_custom_call.1} parent=1 // pred_fallthru
      _
    // Predicated region
    $region14: #{tpu_custom_call.1} parent=1 // pred_check
      _
    $region15: #{tpu_custom_call.1} parent=1 // pred_check_branch
      %42 = sbr.rel (0) target = $region17
    $region16: #{tpu_custom_call.1} parent=1 // pred_region
      _
    $region17: #{tpu_custom_call.1} parent=1 // pred_fallthru
      _
    // Predicated region
    $region18: #{tpu_custom_call.1} parent=1 // pred_check
      _
    $region19: #{tpu_custom_call.1} parent=1 // pred_check_branch
      %44 = sbr.rel (0) target = $region21
    $region20: #{tpu_custom_call.1} parent=1 // pred_region
      _
    $region21: #{tpu_custom_call.1} parent=1 // pred_fallthru
      _
    // Predicated region
    $region22: #{tpu_custom_call.1} parent=1 // pred_check
      _
    $region23: #{tpu_custom_call.1} parent=1 // pred_check_branch
      %46 = sbr.rel (0) target = $region25
    $region24: #{tpu_custom_call.1} parent=1 // pred_region
      _
    $region25: #{tpu_custom_call.1} parent=1 // pred_fallthru
      _
    // Predicated region
    $region26: #{tpu_custom_call.1} parent=1 // pred_check
      _
    $region27: #{tpu_custom_call.1} parent=1 // pred_check_branch
      %48 = sbr.rel (0) target = $region29
    $region28: #{tpu_custom_call.1} parent=1 // pred_region
      _
    $region29: #{tpu_custom_call.1} parent=1 // pred_fallthru
      _
    // Predicated region
    $region30: #{tpu_custom_call.1} parent=1 // pred_check
      _
    $region31: #{tpu_custom_call.1} parent=1 // pred_check_branch
      %50 = sbr.rel (0) target = $region33
    $region32: #{tpu_custom_call.1} parent=1 // pred_region
      %51 = dma.done [#allocation3], 128
    $region33: #{tpu_custom_call.1} parent=1 // pred_fallthru
      _
    // Predicated region
    $region34: #{tpu_custom_call.1} parent=1 // pred_check
      _
    $region35: #{tpu_custom_call.1} parent=1 // pred_check_branch
      %53 = sbr.rel (0) target = $region37
    $region36: #{tpu_custom_call.1} parent=1 // pred_region
      %54 = dma.done [#allocation6], 256
    $region37: #{tpu_custom_call.1} parent=1 // pred_fallthru
      _
    %v56 = vld [vmem:[#allocation2] sm:$0xf]
    %v57 = vld [vmem:[#allocation2 + $0x4] sm:$0xf]
    %v58 = vld [vmem:[#allocation5] sm:$0xf]
    %v59 = vld [vmem:[#allocation5 + $0x4] sm:$0xf]
    %v60 = vld [vmem:[#allocation5 + $0x8] sm:$0xf]
    %v61 = vld [vmem:[#allocation5 + $0xc] sm:$0xf]
    %v62 = vld [vmem:[%s2] sm:$0x1]
    %v64 = vlaneseq
    %v65 = vshrl.u32 %v64, 7
    %v66 = vsub.s32 0, %v65
    %v67 = vrot.slane %v62, %v66
    %v71 = vunpack.c.l.b16 %v56
    %v72 = vunpack.c.l.b16 %v57
    %v73 = vpack.c.b16 %v72, %v71
    %v78 = vunpack.c.l.b16 %v58
    %v79 = vunpack.c.l.b16 %v59
    %v80 = vunpack.c.l.b16 %v60
    %v81 = vunpack.c.l.b16 %v61
    %v82 = vpack.c.b16 %v79, %v78
    %v83 = vpack.c.b16 %v81, %v80
    %vm86 = vcmask 261120
    %v88 = vsel %vm86, %v73, 0
    %90 = vmatprep.subr.bf16.mxu0 0
    %91 = vmatpush1.bf16.msra.mxu0 %v82
    %92 = vmatprep.subr.bf16.mxu0 0
    %93 = vmatpush1.bf16.msra.mxu0 %v83
    %94 = vmatprep.subr.bf16.mxu0 0
    %95 = vmatpush1.bf16.msra.mxu0 0
    %96 = vmatprep.subr.bf16.mxu0 0
    %97 = vmatpush1.bf16.msra.mxu0 0
    %98 = vmatprep.subr.bf16.mxu0 0
    %99 = vmatpush1.bf16.msra.mxu0 0
    %100 = vmatprep.subr.bf16.mxu0 0
    %101 = vmatpush1.bf16.msra.mxu0 0
    %102 = vmatprep.subr.bf16.mxu0 0
    %103 = vmatpush1.bf16.msra.mxu0 0
    %104 = vmatprep.subr.bf16.mxu0 0
    %105 = vmatpush1.bf16.msra.mxu0 0
    %106 = vmatprep.subr.bf16.mxu0 0
    %107 = vmatpush1.bf16.msra.mxu0 0
    %108 = vmatprep.subr.bf16.mxu0 0
    %109 = vmatpush1.bf16.msra.mxu0 0
    %110 = vmatprep.subr.bf16.mxu0 0
    %111 = vmatpush1.bf16.msra.mxu0 0
    %112 = vmatprep.subr.bf16.mxu0 0
    %113 = vmatpush1.bf16.msra.mxu0 0
    %114 = vmatprep.subr.bf16.mxu0 0
    %115 = vmatpush1.bf16.msra.mxu0 0
    %116 = vmatprep.subr.bf16.mxu0 0
    %117 = vmatpush1.bf16.msra.mxu0 0
    %118 = vmatprep.subr.bf16.mxu0 0
    %119 = vmatpush1.bf16.msra.mxu0 0
    %120 = vmatprep.subr.bf16.mxu0 0
    %121 = vmatpush1.bf16.msra.mxu0 0
    %122 = vmatprep.mubr.bf16.mxu0 0
    %123 = vmatmul.mubr.bf16.gmra.mrb[0].mxu0 %v88
    %v124 = vpop.f32.mrb[0].mxu0
    %v125 = vadd.f32 %v67, %v124
    %v126 = vpop.f32.mrb[0].mxu0
    %v127 = vpop.f32.mrb[0].mxu0
    %v128 = vadd.f32 %v67, %v127
    %v129 = vpop.f32.mrb[0].mxu0
    %130 = vdwg.mxu0
    %v131 = vsel %vm86, %v125, -inf
    %132 = vmax.xlane.f32.xlu0 %v131
    %v133 = vpop.xlane.xlu0 %132
    %v134 = vsel %vm86, %v128, -inf
    %135 = vmax.xlane.f32.xlu0 %v134
    %v136 = vpop.xlane.xlu0 %135
    %v137 = vsub.f32 %v125, %v133
    %v138 = vsub.f32 %v128, %v136
    %v139 = vmul.f32 %v137, 1.442695
    %v140 = vpow.pop %v139
    %v141 = vmul.f32 %v138, 1.442695
    %v142 = vpow.pop %v141
    %v143 = vld [vmem:[%s4] sm:$0xff]
    %v144 = vld [vmem:[%s4 + $0x8] sm:$0xff]
    %v145 = vld [vmem:[%s4 + $0x10] sm:$0xff]
    %v146 = vld [vmem:[%s4 + $0x18] sm:$0xff]
    %v148 = vsel %vm86, %v140, 0
    %v151 = vsel %vm86, %v142, 0
    %153 = vmatprep.subr.mxu0 0.0
    %154 = vmatpush1.msra.mxu0 %v143
    %155 = vmatprep.subr.mxu0 0.0
    %156 = vmatpush1.msra.mxu0 %v144
    %157 = vmatprep.subr.mxu0 0.0
    %158 = vmatpush1.msra.mxu0 %v145
    %159 = vmatprep.subr.mxu0 0.0
    %160 = vmatpush1.msra.mxu0 %v146
    %161 = vmatprep.subr.mxu0 0.0
    %162 = vmatpush1.msra.mxu0 0.0
    %163 = vmatprep.subr.mxu0 0.0
    %164 = vmatpush1.msra.mxu0 0.0
    %165 = vmatprep.subr.mxu0 0.0
    %166 = vmatpush1.msra.mxu0 0.0
    %167 = vmatprep.subr.mxu0 0.0
    %168 = vmatpush1.msra.mxu0 0.0
    %169 = vmatprep.subr.mxu0 0.0
    %170 = vmatpush1.msra.mxu0 0.0
    %171 = vmatprep.subr.mxu0 0.0
    %172 = vmatpush1.msra.mxu0 0.0
    %173 = vmatprep.subr.mxu0 0.0
    %174 = vmatpush1.msra.mxu0 0.0
    %175 = vmatprep.subr.mxu0 0.0
    %176 = vmatpush1.msra.mxu0 0.0
    %177 = vmatprep.subr.mxu0 0.0
    %178 = vmatpush1.msra.mxu0 0.0
    %179 = vmatprep.subr.mxu0 0.0
    %180 = vmatpush1.msra.mxu0 0.0
    %181 = vmatprep.subr.mxu0 0.0
    %182 = vmatpush1.msra.mxu0 0.0
    %183 = vmatprep.subr.mxu0 0.0
    %184 = vmatpush1.msra.mxu0 0.0
    %185 = vmatprep.subr.mxu0 0.0
    %186 = vmatpush1.msra.mxu0 0.0
    %187 = vmatprep.subr.mxu0 0.0
    %188 = vmatpush1.msra.mxu0 0.0
    %189 = vmatprep.subr.mxu0 0.0
    %190 = vmatpush1.msra.mxu0 0.0
    %191 = vmatprep.subr.mxu0 0.0
    %192 = vmatpush1.msra.mxu0 0.0
    %193 = vmatprep.subr.mxu0 0.0
    %194 = vmatpush1.msra.mxu0 0.0
    %195 = vmatprep.subr.mxu0 0.0
    %196 = vmatpush1.msra.mxu0 0.0
    %197 = vmatprep.subr.mxu0 0.0
    %198 = vmatpush1.msra.mxu0 0.0
    %199 = vmatprep.subr.mxu0 0.0
    %200 = vmatpush1.msra.mxu0 0.0
    %201 = vmatprep.subr.mxu0 0.0
    %202 = vmatpush1.msra.mxu0 0.0
    %203 = vmatprep.subr.mxu0 0.0
    %204 = vmatpush1.msra.mxu0 0.0
    %205 = vmatprep.subr.mxu0 0.0
    %206 = vmatpush1.msra.mxu0 0.0
    %207 = vmatprep.subr.mxu0 0.0
    %208 = vmatpush1.msra.mxu0 0.0
    %209 = vmatprep.subr.mxu0 0.0
    %210 = vmatpush1.msra.mxu0 0.0
    %211 = vmatprep.subr.mxu0 0.0
    %212 = vmatpush1.msra.mxu0 0.0
    %213 = vmatprep.subr.mxu0 0.0
    %214 = vmatpush1.msra.mxu0 0.0
    %215 = vmatprep.subr.mxu0 0.0
    %216 = vmatpush1.msra.mxu0 0.0
    %217 = vmatprep.mubr.f32.mxu0 0.0
    %218 = vmatmul.mubr.f32.gmra.mrb[0].mxu0 %v148
    %v219 = vpop.f32.mrb[0].mxu0
    %v220 = vadd.f32 0.0, %v219
    %v221 = vpop.f32.mrb[0].mxu0
    %222 = vmatprep.mubr.f32.mxu0 0.0
    %223 = vmatmul.mubr.f32.gmra.mrb[0].mxu0 %v151
    %v224 = vpop.f32.mrb[0].mxu0
    %v225 = vadd.f32 0.0, %v224
    %v226 = vpop.f32.mrb[0].mxu0
    %227 = vdwg.mxu0
    %v228 = vmax.f32 %v220, 1e-30
    %v229 = vmax.f32 %v225, 1e-30
    %v230 = vrcp.pop %v228
    %v231 = vrcp.pop %v229
    %v232 = vmul.f32 %v230, 0.59460354
    %v233 = vmul.f32 %v231, 0.59460354
    %v234 = vld [vmem:[%s5] sm:$0xf]
    %vm235 = vcmask 31744
    %v237 = vsel %vm235, %v232, 0
    %v240 = vsel %vm235, %v233, 0
    %vm242 = vcmask 1043456
    %v244 = vsel %vm242, %v234, 0
    %246 = vmatprep.subr.mxu0 0.0
    %247 = vmatpush1.msra.mxu0 %v244
    %248 = vmatprep.subr.mxu0 0.0
    %249 = vmatpush1.msra.mxu0 0.0
    %250 = vmatprep.subr.mxu0 0.0
    %251 = vmatpush1.msra.mxu0 0.0
    %252 = vmatprep.subr.mxu0 0.0
    %253 = vmatpush1.msra.mxu0 0.0
    %254 = vmatprep.subr.mxu0 0.0
    %255 = vmatpush1.msra.mxu0 0.0
    %256 = vmatprep.subr.mxu0 0.0
    %257 = vmatpush1.msra.mxu0 0.0
    %258 = vmatprep.subr.mxu0 0.0
    %259 = vmatpush1.msra.mxu0 0.0
    %260 = vmatprep.subr.mxu0 0.0
    %261 = vmatpush1.msra.mxu0 0.0
    %262 = vmatprep.subr.mxu0 0.0
    %263 = vmatpush1.msra.mxu0 0.0
    %264 = vmatprep.subr.mxu0 0.0
    %265 = vmatpush1.msra.mxu0 0.0
    %266 = vmatprep.subr.mxu0 0.0
    %267 = vmatpush1.msra.mxu0 0.0
    %268 = vmatprep.subr.mxu0 0.0
    %269 = vmatpush1.msra.mxu0 0.0
    %270 = vmatprep.subr.mxu0 0.0
    %271 = vmatpush1.msra.mxu0 0.0
    %272 = vmatprep.subr.mxu0 0.0
    %273 = vmatpush1.msra.mxu0 0.0
    %274 = vmatprep.subr.mxu0 0.0
    %275 = vmatpush1.msra.mxu0 0.0
    %276 = vmatprep.subr.mxu0 0.0
    %277 = vmatpush1.msra.mxu0 0.0
    %278 = vmatprep.subr.mxu0 0.0
    %279 = vmatpush1.msra.mxu0 0.0
    %280 = vmatprep.subr.mxu0 0.0
    %281 = vmatpush1.msra.mxu0 0.0
    %282 = vmatprep.subr.mxu0 0.0
    %283 = vmatpush1.msra.mxu0 0.0
    %284 = vmatprep.subr.mxu0 0.0
    %285 = vmatpush1.msra.mxu0 0.0
    %286 = vmatprep.subr.mxu0 0.0
    %287 = vmatpush1.msra.mxu0 0.0
    %288 = vmatprep.subr.mxu0 0.0
    %289 = vmatpush1.msra.mxu0 0.0
    %290 = vmatprep.subr.mxu0 0.0
    %291 = vmatpush1.msra.mxu0 0.0
    %292 = vmatprep.subr.mxu0 0.0
    %293 = vmatpush1.msra.mxu0 0.0
    %294 = vmatprep.subr.mxu0 0.0
    %295 = vmatpush1.msra.mxu0 0.0
    %296 = vmatprep.subr.mxu0 0.0
    %297 = vmatpush1.msra.mxu0 0.0
    %298 = vmatprep.subr.mxu0 0.0
    %299 = vmatpush1.msra.mxu0 0.0
    %300 = vmatprep.subr.mxu0 0.0
    %301 = vmatpush1.msra.mxu0 0.0
    %302 = vmatprep.subr.mxu0 0.0
    %303 = vmatpush1.msra.mxu0 0.0
    %304 = vmatprep.subr.mxu0 0.0
    %305 = vmatpush1.msra.mxu0 0.0
    %306 = vmatprep.subr.mxu0 0.0
    %307 = vmatpush1.msra.mxu0 0.0
    %308 = vmatprep.subr.mxu0 0.0
    %309 = vmatpush1.msra.mxu0 0.0
    %310 = vmatprep.mubr.f32.mxu0 0.0
    %311 = vmatmul.mubr.f32.gmra.mrb[0].mxu0 %v237
    %v312 = vpop.f32.mrb[0].mxu0
    %v313 = vadd.f32 0.0, %v312
    %v314 = vpop.f32.mrb[0].mxu0
    %315 = vmatprep.mubr.f32.mxu0 0.0
    %316 = vmatmul.mubr.f32.gmra.mrb[0].mxu0 %v240
    %v317 = vpop.f32.mrb[0].mxu0
    %v318 = vadd.f32 0.0, %v317
    %v319 = vpop.f32.mrb[0].mxu0
    %320 = vdwg.mxu0
    %v321 = vmul.f32 %v140, %v313
    %v322 = vmul.f32 %v142, %v318
    %v323 = vpack.c.bf16 %v125, %v125
    %v324 = vpack.c.bf16 %v128, %v128
    %v325 = vld [vmem:[%s3] sm:$0xff]
    %v326 = vld [vmem:[%s3 + $0x8] sm:$0xff]
    %v327 = vld [vmem:[%s3 + $0x10] sm:$0xff]
    %v328 = vld [vmem:[%s3 + $0x18] sm:$0xff]
    %330 = vrot.lane.b32.xlu0 %v323, 96
    %v331 = vpop.permute.xlu0 %330
    %333 = vxpose.xlu0.c.b16.start [1/8] %v331, 128
    %334 = vxpose.xlu0.c.b16.cont [2/8] 0, 128
    %335 = vxpose.xlu0.c.b16.cont [3/8] 0, 128
    %336 = vxpose.xlu0.c.b16.cont [4/8] 0, 128
    %337 = vxpose.xlu0.c.b16.cont [5/8] 0, 128
    %338 = vxpose.xlu0.c.b16.cont [6/8] 0, 128
    %339 = vxpose.xlu0.c.b16.cont [7/8] 0, 128
    %340 = vxpose.xlu0.c.b16.end [8/8] 0, 128
    %v341 = vpop.trf.xlu0
    %v342 = vpop.trf.xlu0
    %v343 = vpop.trf.xlu0
    %v344 = vpop.trf.xlu0
    %v345 = vpop.trf.xlu0
    %v346 = vpop.trf.xlu0
    %v347 = vpop.trf.xlu0
    %v348 = vpop.trf.xlu0
    %349 = vrot.lane.b32.xlu0 %v323, 64
    %v350 = vpop.permute.xlu0 %349
    %vm351 = vcmask 64512
    %v353 = vsel %vm351, %v341, 0
    %v356 = vsel %vm351, %v342, 0
    %v359 = vsel %vm242, %v350, 0
    %361 = vmatprep.subr.bf16.mxu0 0
    %362 = vmatpush1.bf16.msra.mxu0 %v359
    %363 = vmatprep.subr.bf16.mxu0 0
    %364 = vmatpush1.bf16.msra.mxu0 0
    %365 = vmatprep.subr.bf16.mxu0 0
    %366 = vmatpush1.bf16.msra.mxu0 0
    %367 = vmatprep.subr.bf16.mxu0 0
    %368 = vmatpush1.bf16.msra.mxu0 0
    %369 = vmatprep.subr.bf16.mxu0 0
    %370 = vmatpush1.bf16.msra.mxu0 0
    %371 = vmatprep.subr.bf16.mxu0 0
    %372 = vmatpush1.bf16.msra.mxu0 0
    %373 = vmatprep.subr.bf16.mxu0 0
    %374 = vmatpush1.bf16.msra.mxu0 0
    %375 = vmatprep.subr.bf16.mxu0 0
    %376 = vmatpush1.bf16.msra.mxu0 0
    %377 = vmatprep.subr.bf16.mxu0 0
    %378 = vmatpush1.bf16.msra.mxu0 0
    %379 = vmatprep.subr.bf16.mxu0 0
    %380 = vmatpush1.bf16.msra.mxu0 0
    %381 = vmatprep.subr.bf16.mxu0 0
    %382 = vmatpush1.bf16.msra.mxu0 0
    %383 = vmatprep.subr.bf16.mxu0 0
    %384 = vmatpush1.bf16.msra.mxu0 0
    %385 = vmatprep.subr.bf16.mxu0 0
    %386 = vmatpush1.bf16.msra.mxu0 0
    %387 = vmatprep.subr.bf16.mxu0 0
    %388 = vmatpush1.bf16.msra.mxu0 0
    %389 = vmatprep.subr.bf16.mxu0 0
    %390 = vmatpush1.bf16.msra.mxu0 0
    %391 = vmatprep.subr.bf16.mxu0 0
    %392 = vmatpush1.bf16.msra.mxu0 0
    %393 = vmatprep.mubr.bf16.mxu0 0
    %394 = vmatmul.mubr.bf16.gmra.mrb[0].mxu0 %v353
    %v395 = vpop.f32.mrb[0].mxu0
    %v396 = vadd.f32 %v325, %v395
    %v397 = vpop.f32.mrb[0].mxu0
    %v398 = vpop.f32.mrb[0].mxu0
    %v399 = vadd.f32 %v326, %v398
    %v400 = vpop.f32.mrb[0].mxu0
    %401 = vmatprep.mubr.bf16.mxu0 0
    %402 = vmatmul.mubr.bf16.gmra.mrb[0].mxu0 %v356
    %v403 = vpop.f32.mrb[0].mxu0
    %v404 = vadd.f32 %v327, %v403
    %v405 = vpop.f32.mrb[0].mxu0
    %v406 = vpop.f32.mrb[0].mxu0
    %v407 = vadd.f32 %v328, %v406
    %v408 = vpop.f32.mrb[0].mxu0
    %409 = vdwg.mxu0
    %411 = vrot.lane.b32.xlu0 %v324, 96
    %v412 = vpop.permute.xlu0 %411
    %414 = vxpose.xlu0.c.b16.start [1/8] %v412, 128
    %415 = vxpose.xlu0.c.b16.cont [2/8] 0, 128
    %416 = vxpose.xlu0.c.b16.cont [3/8] 0, 128
    %417 = vxpose.xlu0.c.b16.cont [4/8] 0, 128
    %418 = vxpose.xlu0.c.b16.cont [5/8] 0, 128
    %419 = vxpose.xlu0.c.b16.cont [6/8] 0, 128
    %420 = vxpose.xlu0.c.b16.cont [7/8] 0, 128
    %421 = vxpose.xlu0.c.b16.end [8/8] 0, 128
    %v422 = vpop.trf.xlu0
    %v423 = vpop.trf.xlu0
    %v424 = vpop.trf.xlu0
    %v425 = vpop.trf.xlu0
    %v426 = vpop.trf.xlu0
    %v427 = vpop.trf.xlu0
    %v428 = vpop.trf.xlu0
    %v429 = vpop.trf.xlu0
    %430 = vrot.lane.b32.xlu0 %v324, 64
    %v431 = vpop.permute.xlu0 %430
    %v433 = vsel %vm351, %v422, 0
    %v436 = vsel %vm351, %v423, 0
    %v439 = vsel %vm242, %v431, 0
    %441 = vmatprep.subr.bf16.mxu0 0
    %442 = vmatpush1.bf16.msra.mxu0 %v439
    %443 = vmatprep.subr.bf16.mxu0 0
    %444 = vmatpush1.bf16.msra.mxu0 0
    %445 = vmatprep.subr.bf16.mxu0 0
    %446 = vmatpush1.bf16.msra.mxu0 0
    %447 = vmatprep.subr.bf16.mxu0 0
    %448 = vmatpush1.bf16.msra.mxu0 0
    %449 = vmatprep.subr.bf16.mxu0 0
    %450 = vmatpush1.bf16.msra.mxu0 0
    %451 = vmatprep.subr.bf16.mxu0 0
    %452 = vmatpush1.bf16.msra.mxu0 0
    %453 = vmatprep.subr.bf16.mxu0 0
    %454 = vmatpush1.bf16.msra.mxu0 0
    %455 = vmatprep.subr.bf16.mxu0 0
    %456 = vmatpush1.bf16.msra.mxu0 0
    %457 = vmatprep.subr.bf16.mxu0 0
    %458 = vmatpush1.bf16.msra.mxu0 0
    %459 = vmatprep.subr.bf16.mxu0 0
    %460 = vmatpush1.bf16.msra.mxu0 0
    %461 = vmatprep.subr.bf16.mxu0 0
    %462 = vmatpush1.bf16.msra.mxu0 0
    %463 = vmatprep.subr.bf16.mxu0 0
    %464 = vmatpush1.bf16.msra.mxu0 0
    %465 = vmatprep.subr.bf16.mxu0 0
    %466 = vmatpush1.bf16.msra.mxu0 0
    %467 = vmatprep.subr.bf16.mxu0 0
    %468 = vmatpush1.bf16.msra.mxu0 0
    %469 = vmatprep.subr.bf16.mxu0 0
    %470 = vmatpush1.bf16.msra.mxu0 0
    %471 = vmatprep.subr.bf16.mxu0 0
    %472 = vmatpush1.bf16.msra.mxu0 0
    %473 = vmatprep.mubr.bf16.mxu0 0
    %474 = vmatmul.mubr.bf16.gmra.mrb[0].mxu0 %v433
    %v475 = vpop.f32.mrb[0].mxu0
    %v476 = vadd.f32 %v325, %v475
    %v477 = vpop.f32.mrb[0].mxu0
    %v478 = vpop.f32.mrb[0].mxu0
    %v479 = vadd.f32 %v326, %v478
    %v480 = vpop.f32.mrb[0].mxu0
    %481 = vmatprep.mubr.bf16.mxu0 0
    %482 = vmatmul.mubr.bf16.gmra.mrb[0].mxu0 %v436
    %v483 = vpop.f32.mrb[0].mxu0
    %v484 = vadd.f32 %v327, %v483
    %v485 = vpop.f32.mrb[0].mxu0
    %v486 = vpop.f32.mrb[0].mxu0
    %v487 = vadd.f32 %v328, %v486
    %v488 = vpop.f32.mrb[0].mxu0
    %489 = vdwg.mxu0
    %v490 = vsel %vm86, %v396, -inf
    %v491 = vsel %vm86, %v399, -inf
    %v492 = vsel %vm86, %v404, -inf
    %v493 = vmax.f32 %v490, %v492
    %v494 = vsel %vm86, %v407, -inf
    %v495 = vmax.f32 %v491, %v494
    %v496 = vmax.f32 %v493, %v495
    %v497 = vrot.slane %v496, 4
    %v498 = vmax.f32 %v496, %v497
    %v499 = vrot.slane %v498, 2
    %v500 = vmax.f32 %v498, %v499
    %v501 = vrot.slane %v500, 1
    %v502 = vmax.f32 %v500, %v501
    %v503 = vsel %vm86, %v476, -inf
    %v504 = vsel %vm86, %v479, -inf
    %v505 = vsel %vm86, %v484, -inf
    %v506 = vmax.f32 %v503, %v505
    %v507 = vsel %vm86, %v487, -inf
    %v508 = vmax.f32 %v504, %v507
    %v509 = vmax.f32 %v506, %v508
    %v510 = vrot.slane %v509, 4
    %v511 = vmax.f32 %v509, %v510
    %v512 = vrot.slane %v511, 2
    %v513 = vmax.f32 %v511, %v512
    %v514 = vrot.slane %v513, 1
    %v515 = vmax.f32 %v513, %v514
    %v516 = vsub.f32 %v396, %v502
    %v517 = vsub.f32 %v399, %v502
    %v518 = vsub.f32 %v404, %v502
    %v519 = vsub.f32 %v407, %v502
    %v520 = vsub.f32 %v476, %v515
    %v521 = vsub.f32 %v479, %v515
    %v522 = vsub.f32 %v484, %v515
    %v523 = vsub.f32 %v487, %v515
    %v524 = vmul.f32 %v516, 1.442695
    %v525 = vpow.pop %v524
    %v526 = vmul.f32 %v517, 1.442695
    %v527 = vpow.pop %v526
    %v528 = vmul.f32 %v518, 1.442695
    %v529 = vpow.pop %v528
    %v530 = vmul.f32 %v519, 1.442695
    %v531 = vpow.pop %v530
    %v532 = vmul.f32 %v520, 1.442695
    %v533 = vpow.pop %v532
    %v534 = vmul.f32 %v521, 1.442695
    %v535 = vpow.pop %v534
    %v536 = vmul.f32 %v522, 1.442695
    %v537 = vpow.pop %v536
    %v538 = vmul.f32 %v523, 1.442695
    %v539 = vpow.pop %v538
    %v540 = vsel %vm86, %v525, 0.0
    %v541 = vsel %vm86, %v527, 0.0
    %v542 = vadd.f32 %v540, %v541
    %v543 = vsel %vm86, %v529, 0.0
    %v544 = vadd.f32 %v542, %v543
    %v545 = vsel %vm86, %v531, 0.0
    %v546 = vadd.f32 %v544, %v545
    %v547 = vrot.slane %v546, 4
    %v548 = vadd.f32 %v546, %v547
    %v549 = vrot.slane %v548, 2
    %v550 = vadd.f32 %v548, %v549
    %v551 = vrot.slane %v550, 1
    %v552 = vadd.f32 %v550, %v551
    %v553 = vsel %vm86, %v533, 0.0
    %v554 = vsel %vm86, %v535, 0.0
    %v555 = vadd.f32 %v553, %v554
    %v556 = vsel %vm86, %v537, 0.0
    %v557 = vadd.f32 %v555, %v556
    %v558 = vsel %vm86, %v539, 0.0
    %v559 = vadd.f32 %v557, %v558
    %v560 = vrot.slane %v559, 4
    %v561 = vadd.f32 %v559, %v560
    %v562 = vrot.slane %v561, 2
    %v563 = vadd.f32 %v561, %v562
    %v564 = vrot.slane %v563, 1
    %v565 = vadd.f32 %v563, %v564
    %v566 = vrcp.pop %v552
    %v567 = vrcp.pop %v565
    %v568 = vmul.f32 %v525, %v566
    %v569 = vmul.f32 %v527, %v566
    %v570 = vmul.f32 %v529, %v566
    %v571 = vmul.f32 %v531, %v566
    %v572 = vmul.f32 %v533, %v567
    %v573 = vmul.f32 %v535, %v567
    %v574 = vmul.f32 %v537, %v567
    %v575 = vmul.f32 %v539, %v567
    %v576 = vpack.c.bf16 %v321, %v321
    %v577 = vpack.c.bf16 %v322, %v322
    %v578 = vpack.c.bf16 %v569, %v568
    %v579 = vpack.c.bf16 %v571, %v570
    %v580 = vpack.c.bf16 %v573, %v572
    %v581 = vpack.c.bf16 %v575, %v574
    %v583 = vsel %vm86, %v576, 0
    %585 = vmatprep.subr.bf16.mxu0 0
    %586 = vmatpush1.bf16.msra.mxu0 %v578
    %587 = vmatprep.subr.bf16.mxu0 0
    %588 = vmatpush1.bf16.msra.mxu0 %v579
    %589 = vmatprep.subr.bf16.mxu0 0
    %590 = vmatpush1.bf16.msra.mxu0 0
    %591 = vmatprep.subr.bf16.mxu0 0
    %592 = vmatpush1.bf16.msra.mxu0 0
    %593 = vmatprep.subr.bf16.mxu0 0
    %594 = vmatpush1.bf16.msra.mxu0 0
    %595 = vmatprep.subr.bf16.mxu0 0
    %596 = vmatpush1.bf16.msra.mxu0 0
    %597 = vmatprep.subr.bf16.mxu0 0
    %598 = vmatpush1.bf16.msra.mxu0 0
    %599 = vmatprep.subr.bf16.mxu0 0
    %600 = vmatpush1.bf16.msra.mxu0 0
    %601 = vmatprep.subr.bf16.mxu0 0
    %602 = vmatpush1.bf16.msra.mxu0 0
    %603 = vmatprep.subr.bf16.mxu0 0
    %604 = vmatpush1.bf16.msra.mxu0 0
    %605 = vmatprep.subr.bf16.mxu0 0
    %606 = vmatpush1.bf16.msra.mxu0 0
    %607 = vmatprep.subr.bf16.mxu0 0
    %608 = vmatpush1.bf16.msra.mxu0 0
    %609 = vmatprep.subr.bf16.mxu0 0
    %610 = vmatpush1.bf16.msra.mxu0 0
    %611 = vmatprep.subr.bf16.mxu0 0
    %612 = vmatpush1.bf16.msra.mxu0 0
    %613 = vmatprep.subr.bf16.mxu0 0
    %614 = vmatpush1.bf16.msra.mxu0 0
    %615 = vmatprep.subr.bf16.mxu0 0
    %616 = vmatpush1.bf16.msra.mxu0 0
    %617 = vmatprep.mubr.bf16.mxu0 0
    %618 = vmatmul.mubr.bf16.gmra.mrb[0].mxu0 %v583
    %v619 = vpop.f32.mrb[0].mxu0
    %v620 = vadd.f32 0.0, %v619
    %v621 = vpop.f32.mrb[0].mxu0
    %v622 = vpop.f32.mrb[0].mxu0
    %v623 = vpop.f32.mrb[0].mxu0
    %624 = vdwg.mxu0
    %v626 = vsel %vm86, %v577, 0
    %628 = vmatprep.subr.bf16.mxu0 0
    %629 = vmatpush1.bf16.msra.mxu0 %v580
    %630 = vmatprep.subr.bf16.mxu0 0
    %631 = vmatpush1.bf16.msra.mxu0 %v581
    %632 = vmatprep.subr.bf16.mxu0 0
    %633 = vmatpush1.bf16.msra.mxu0 0
    %634 = vmatprep.subr.bf16.mxu0 0
    %635 = vmatpush1.bf16.msra.mxu0 0
    %636 = vmatprep.subr.bf16.mxu0 0
    %637 = vmatpush1.bf16.msra.mxu0 0
    %638 = vmatprep.subr.bf16.mxu0 0
    %639 = vmatpush1.bf16.msra.mxu0 0
    %640 = vmatprep.subr.bf16.mxu0 0
    %641 = vmatpush1.bf16.msra.mxu0 0
    %642 = vmatprep.subr.bf16.mxu0 0
    %643 = vmatpush1.bf16.msra.mxu0 0
    %644 = vmatprep.subr.bf16.mxu0 0
    %645 = vmatpush1.bf16.msra.mxu0 0
    %646 = vmatprep.subr.bf16.mxu0 0
    %647 = vmatpush1.bf16.msra.mxu0 0
    %648 = vmatprep.subr.bf16.mxu0 0
    %649 = vmatpush1.bf16.msra.mxu0 0
    %650 = vmatprep.subr.bf16.mxu0 0
    %651 = vmatpush1.bf16.msra.mxu0 0
    %652 = vmatprep.subr.bf16.mxu0 0
    %653 = vmatpush1.bf16.msra.mxu0 0
    %654 = vmatprep.subr.bf16.mxu0 0
    %655 = vmatpush1.bf16.msra.mxu0 0
    %656 = vmatprep.subr.bf16.mxu0 0
    %657 = vmatpush1.bf16.msra.mxu0 0
    %658 = vmatprep.subr.bf16.mxu0 0
    %659 = vmatpush1.bf16.msra.mxu0 0
    %660 = vmatprep.mubr.bf16.mxu0 0
    %661 = vmatmul.mubr.bf16.gmra.mrb[0].mxu0 %v626
    %v662 = vpop.f32.mrb[0].mxu0
    %v663 = vadd.f32 0.0, %v662
    %v664 = vpop.f32.mrb[0].mxu0
    %v665 = vpop.f32.mrb[0].mxu0
    %v666 = vpop.f32.mrb[0].mxu0
    %667 = vdwg.mxu0
    %v668 = vpack.c.bf16 %v663, %v620
    %v669 = vld [vmem:[%s6] sm:$0xf]
    %v670 = vld [vmem:[%s6 + $0x4] sm:$0xf]
    %v671 = vld [vmem:[%s6 + $0x8] sm:$0xf]
    %v672 = vld [vmem:[%s6 + $0xc] sm:$0xf]
    %v677 = vunpack.c.l.b16 %v669
    %v678 = vunpack.c.l.b16 %v670
    %v679 = vunpack.c.l.b16 %v671
    %v680 = vunpack.c.l.b16 %v672
    %v681 = vpack.c.b16 %v678, %v677
    %v682 = vpack.c.b16 %v680, %v679
    %v686 = vsel %vm86, %v668, 0
    %688 = vmatprep.subr.bf16.mxu0 0
    %689 = vmatpush1.bf16.msra.mxu0 %v681
    %690 = vmatprep.subr.bf16.mxu0 0
    %691 = vmatpush1.bf16.msra.mxu0 %v682
    %692 = vmatprep.subr.bf16.mxu0 0
    %693 = vmatpush1.bf16.msra.mxu0 0
    %694 = vmatprep.subr.bf16.mxu0 0
    %695 = vmatpush1.bf16.msra.mxu0 0
    %696 = vmatprep.subr.bf16.mxu0 0
    %697 = vmatpush1.bf16.msra.mxu0 0
    %698 = vmatprep.subr.bf16.mxu0 0
    %699 = vmatpush1.bf16.msra.mxu0 0
    %700 = vmatprep.subr.bf16.mxu0 0
    %701 = vmatpush1.bf16.msra.mxu0 0
    %702 = vmatprep.subr.bf16.mxu0 0
    %703 = vmatpush1.bf16.msra.mxu0 0
    %704 = vmatprep.subr.bf16.mxu0 0
    %705 = vmatpush1.bf16.msra.mxu0 0
    %706 = vmatprep.subr.bf16.mxu0 0
    %707 = vmatpush1.bf16.msra.mxu0 0
    %708 = vmatprep.subr.bf16.mxu0 0
    %709 = vmatpush1.bf16.msra.mxu0 0
    %710 = vmatprep.subr.bf16.mxu0 0
    %711 = vmatpush1.bf16.msra.mxu0 0
    %712 = vmatprep.subr.bf16.mxu0 0
    %713 = vmatpush1.bf16.msra.mxu0 0
    %714 = vmatprep.subr.bf16.mxu0 0
    %715 = vmatpush1.bf16.msra.mxu0 0
    %716 = vmatprep.subr.bf16.mxu0 0
    %717 = vmatpush1.bf16.msra.mxu0 0
    %718 = vmatprep.subr.bf16.mxu0 0
    %719 = vmatpush1.bf16.msra.mxu0 0
    %720 = vmatprep.mubr.bf16.mxu0 0
    %721 = vmatmul.mubr.bf16.gmra.mrb[0].mxu0 %v686
    %v722 = vpop.f32.mrb[0].mxu0
    %v723 = vadd.f32 0.0, %v722
    %v724 = vpop.f32.mrb[0].mxu0
    %v725 = vpop.f32.mrb[0].mxu0
    %v726 = vadd.f32 0.0, %v725
    %v727 = vpop.f32.mrb[0].mxu0
    %728 = vdwg.mxu0
    %729 = vst.msk [vmem:[#allocation7] sm:$0xff] %vm86, %v723
    %730 = vst.msk [vmem:[#allocation7 + $0x8] sm:$0xff] %vm86, %v726
    // Predicated region
    $region38: #{tpu_custom_call.1} parent=1 // pred_check
      _
    $region39: #{tpu_custom_call.1} parent=1 // pred_check_branch
      %732 = sbr.rel (0) target = $region41
    $region40: #{tpu_custom_call.1} parent=1 // pred_region
      %s734 = ssub.s32 256, 256
      %735 = vsyncadd [#allocation4], %s734
      %s736 = sshll.u32 [#allocation7], 4
      %s737 = int_to_ptr.vmem [resolvable:$true] %s736
      %742 = dma.vmem_to_hbm [thread:$0]  %s737, 256, %s7, [#allocation4], 128, 128, 8
    $region41: #{tpu_custom_call.1} parent=1 // pred_fallthru
      _
    // Predicated region
    $region42: #{tpu_custom_call.1} parent=1 // pred_check
      _
    $region43: #{tpu_custom_call.1} parent=1 // pred_check_branch
      %744 = sbr.rel (0) target = $region45
    $region44: #{tpu_custom_call.1} parent=1 // pred_region
      %745 = dma.done [#allocation4], 256
    $region45: #{tpu_custom_call.1} parent=1 // pred_fallthru
      _
    %746 = vsyncpa [#allocation3], 1
    %747 = vsyncpa [#allocation6], 1
    %748 = vsyncpa [#allocation4], 1

</llo_original>
